<compile_context>
chip_gen: v7x
topology: tpu7x:2x2x1
jax: 0.10.0
libtpu: 0.0.40
codegen_flags: <defaults>
</compile_context>

<pallas_src>
import functools

import jax
import jax.numpy as jnp
from jax import lax
from jax.experimental import pallas as pl
from jax.experimental.pallas import tpu as pltpu

_EPS = 1e-5


def _round_up(x, m):
    return ((x + m - 1) // m) * m


def _cdiv(a, b):
    return (a + b - 1) // b


# ----------------------------------------------------------------------------
# Kernels
# ----------------------------------------------------------------------------
def _bn_scale_shift(s_part_ref, ss_part_ref, g_ref, be_ref, inv_b, eps):
    """Fold per-core partial sums into fused BN scale/shift ((1,F) elementwise)."""
    s = jnp.sum(s_part_ref[...], axis=0)            # (1, F)
    ss = jnp.sum(ss_part_ref[...], axis=0)          # (1, F)
    mu = s * inv_b
    var = jnp.maximum(ss * inv_b - mu * mu, 0.0)    # biased variance
    scale = g_ref[...] * lax.rsqrt(var + eps)       # EUP rsqrt
    shift = be_ref[...] - mu * scale
    return scale, shift


def _stats1_kernel(x_ref, w1_ref, s_ref, ss_ref):
    """Per batch tile: h = x@W1 ; accumulate per-core column sum(h), sum(h*h)."""
    @pl.when(pl.program_id(1) == 0)
    def _():
        s_ref[...] = jnp.zeros_like(s_ref)
        ss_ref[...] = jnp.zeros_like(ss_ref)

    # Zero-padded batch rows of x give zero rows of h -> contribute nothing.
    h = jnp.dot(x_ref[...].astype(w1_ref.dtype), w1_ref[...],
                preferred_element_type=jnp.float32)
    s_ref[...] += jnp.sum(h, axis=0, keepdims=True).reshape(1, 1, -1)
    ss_ref[...] += jnp.sum(h * h, axis=0, keepdims=True).reshape(1, 1, -1)


def _stats2_kernel(x_ref, w1_ref, s1_ref, ss1_ref, g1_ref, be1_ref, w2_ref,
                   s_ref, ss_ref, *, tb, nt_per, batch, inv_b, eps):
    """Per tile: recompute h, apply BN1+ReLU+W2; accumulate per-core BN2 sums."""
    @pl.when(pl.program_id(1) == 0)
    def _():
        s_ref[...] = jnp.zeros_like(s_ref)
        ss_ref[...] = jnp.zeros_like(ss_ref)

    sc1, sh1 = _bn_scale_shift(s1_ref, ss1_ref, g1_ref, be1_ref, inv_b, eps)

    h = jnp.dot(x_ref[...].astype(w1_ref.dtype), w1_ref[...],
                preferred_element_type=jnp.float32)
    h = jnp.maximum(h * sc1 + sh1, 0.0)             # fused BN1 + ReLU
    o = jnp.dot(h.astype(w2_ref.dtype), w2_ref[...],
                preferred_element_type=jnp.float32)

    # Mask padded batch rows so BN2 statistics only see the true batch.
    tile = pl.program_id(0) * nt_per + pl.program_id(1)
    row = tile * tb + lax.broadcasted_iota(jnp.int32, (tb, 1), 0)
    o = jnp.where(row < batch, o, 0.0)

    s_ref[...] += jnp.sum(o, axis=0, keepdims=True).reshape(1, 1, -1)
    ss_ref[...] += jnp.sum(o * o, axis=0, keepdims=True).reshape(1, 1, -1)


def _apply_kernel(x_ref, w1_ref, s1_ref, ss1_ref, g1_ref, be1_ref, w2_ref,
                  s2_ref, ss2_ref, g2_ref, be2_ref, o_ref, *, inv_b, eps):
    """Per tile: full forward with both BNs fused; un-padded output store."""
    sc1, sh1 = _bn_scale_shift(s1_ref, ss1_ref, g1_ref, be1_ref, inv_b, eps)
    sc2, sh2 = _bn_scale_shift(s2_ref, ss2_ref, g2_ref, be2_ref, inv_b, eps)

    h = jnp.dot(x_ref[...].astype(w1_ref.dtype), w1_ref[...],
                preferred_element_type=jnp.float32)
    h = jnp.maximum(h * sc1 + sh1, 0.0)
    o = jnp.dot(h.astype(w2_ref.dtype), w2_ref[...],
                preferred_element_type=jnp.float32)
    o_ref[...] = (o * sc2 + sh2).astype(o_ref.dtype)


# ----------------------------------------------------------------------------
# Wrapper helpers
# ----------------------------------------------------------------------------
def _vmem_budget_bytes():
    """Per-generation VMEM limit: ~3/4 of physical, capped at 112 MiB."""
    cap = 64 * 1024 * 1024                      # conservative (v7x-sized) fallback
    try:
        info = pltpu.get_tpu_info()
        cap = int(getattr(info, "vmem_capacity_bytes", cap) or cap)
    except Exception:
        pass
    return min((cap * 3) // 4, 112 * 1024 * 1024)


def _pick_batch_tile(batch, in_size, hp, out_size, budget_bytes):
    """Largest batch tile (<=1024, multiple of 8) whose working set fits VMEM."""
    resident = (2 * 2 * (in_size * hp + hp * out_size)   # bf16 weights (dbl-buffered)
                + 2 * 4 * 2 * (hp + out_size)            # f32 gamma/beta
                + 2 * 4 * 4 * (hp + out_size))           # f32 stats partials in/out
    per_row = (2 * 4 * in_size       # x tile, f32, double-buffered
               + 2 * 4 * out_size    # output tile, f32, double-buffered
               + 2 * in_size         # bf16 cast of x tile
               + 6 * hp              # h (f32) + bf16 cast of h
               + 4 * out_size)       # o (f32)
    tb = min(1024, _round_up(batch, 8))
    while tb > 8 and resident + tb * per_row > budget_bytes:
        tb = max(8, _round_up(tb // 2, 8))
    return tb


# ----------------------------------------------------------------------------
# Forward wrapper
# ----------------------------------------------------------------------------
def embedding_transform2(x, w1, b1, g1, be1, w2, b2, g2, be2,
                         *, eps=_EPS, block_batch=None):
    """x: (B, input_size) f32 -> (B, out_size) f32.  Weights given as (in, out)."""
    del b1, b2  # exactly cancelled by train-mode BatchNorm mean subtraction
    f32, bf16 = jnp.float32, jnp.bfloat16

    B, in_size = x.shape
    hid = w1.shape[1]
    out_size = w2.shape[1]
    Hp = _round_up(hid, 128)       # hidden axis stays lane-dense (BN1 + matmul-2 K)

    vmem_limit = _vmem_budget_bytes()
    TB = block_batch or _pick_batch_tile(B, in_size, Hp, out_size, vmem_limit)
    nt = _cdiv(B, TB)
    nsplit = 2 if nt >= 2 else 1   # per-core partial sums (v7x has 2 TensorCores)
    nt_per = _cdiv(nt, nsplit)
    nt_total = nsplit * nt_per
    Bp = nt_total * TB

    # Only the batch axis (zero rows) and the hidden axis of W1/W2/BN1 params
    # are padded; the input and output feature axes stay un-padded.
    xp = jnp.pad(x.astype(f32), ((0, Bp - B), (0, 0)))
    w1p = jnp.pad(w1.astype(f32), ((0, 0), (0, Hp - hid))).astype(bf16)
    w2p = jnp.pad(w2.astype(f32), ((0, Hp - hid), (0, 0))).astype(bf16)
    g1p = jnp.pad(g1.reshape(1, -1).astype(f32), ((0, 0), (0, Hp - hid)))
    be1p = jnp.pad(be1.reshape(1, -1).astype(f32), ((0, 0), (0, Hp - hid)))
    g2p = g2.reshape(1, -1).astype(f32)
    be2p = be2.reshape(1, -1).astype(f32)

    # BlockSpecs. Grid-invariant operands use constant index_maps: they stay
    # VMEM-resident and are not re-DMA'd when the block index is unchanged.
    x_ab = pl.BlockSpec((TB, in_size), lambda c, i: (c * nt_per + i, 0))
    x_c = pl.BlockSpec((TB, in_size), lambda i: (i, 0))

    def full_ab(shape):
        return pl.BlockSpec(shape, lambda c, i: (0,) * len(shape))

    def full_c(shape):
        return pl.BlockSpec(shape, lambda i: (0,) * len(shape))

    stat1_out = pl.BlockSpec((1, 1, Hp), lambda c, i: (c, 0, 0))
    stat2_out = pl.BlockSpec((1, 1, out_size), lambda c, i: (c, 0, 0))

    cp_reduce = pltpu.CompilerParams(
        dimension_semantics=("parallel", "arbitrary"), vmem_limit_bytes=vmem_limit)
    cp_apply = pltpu.CompilerParams(
        dimension_semantics=("parallel",), vmem_limit_bytes=vmem_limit)

    inv_b = 1.0 / B
    mm1_flops = 2 * Bp * in_size * Hp
    mm2_flops = 2 * Bp * Hp * out_size
    x_bytes = Bp * in_size * 4
    w_bytes = (in_size * Hp + Hp * out_size) * 2
    bn_bytes = 4 * (2 * nsplit * (Hp + out_size) + 2 * (Hp + out_size))

    # ---- Pass A: BN1 batch statistics (per-core partial sums) ---------------
    s1, ss1 = pl.pallas_call(
        _stats1_kernel,
        grid=(nsplit, nt_per),
        in_specs=[x_ab, full_ab((in_size, Hp))],
        out_specs=(stat1_out, stat1_out),
        out_shape=(jax.ShapeDtypeStruct((nsplit, 1, Hp), f32),
                   jax.ShapeDtypeStruct((nsplit, 1, Hp), f32)),
        compiler_params=cp_reduce,
        cost_estimate=pl.CostEstimate(
            flops=mm1_flops, transcendentals=0,
            bytes_accessed=x_bytes + in_size * Hp * 2 + 2 * nsplit * Hp * 4),
    )(xp, w1p)

    # ---- Pass B: BN2 batch statistics (BN1 derived in-kernel from s1/ss1) ---
    s2, ss2 = pl.pallas_call(
        functools.partial(_stats2_kernel, tb=TB, nt_per=nt_per, batch=B,
                          inv_b=inv_b, eps=eps),
        grid=(nsplit, nt_per),
        in_specs=[x_ab, full_ab((in_size, Hp)),
                  full_ab((nsplit, 1, Hp)), full_ab((nsplit, 1, Hp)),
                  full_ab((1, Hp)), full_ab((1, Hp)),
                  full_ab((Hp, out_size))],
        out_specs=(stat2_out, stat2_out),
        out_shape=(jax.ShapeDtypeStruct((nsplit, 1, out_size), f32),
                   jax.ShapeDtypeStruct((nsplit, 1, out_size), f32)),
        compiler_params=cp_reduce,
        cost_estimate=pl.CostEstimate(
            flops=mm1_flops + mm2_flops, transcendentals=nt_total * Hp,
            bytes_accessed=x_bytes + w_bytes + bn_bytes),
    )(xp, w1p, s1, ss1, g1p, be1p, w2p)

    # ---- Pass C: full forward, both BNs fused, un-padded output store -------
    out_p = pl.pallas_call(
        functools.partial(_apply_kernel, inv_b=inv_b, eps=eps),
        grid=(nt_total,),
        in_specs=[x_c, full_c((in_size, Hp)),
                  full_c((nsplit, 1, Hp)), full_c((nsplit, 1, Hp)),
                  full_c((1, Hp)), full_c((1, Hp)),
                  full_c((Hp, out_size)),
                  full_c((nsplit, 1, out_size)), full_c((nsplit, 1, out_size)),
                  full_c((1, out_size)), full_c((1, out_size))],
        out_specs=pl.BlockSpec((TB, out_size), lambda i: (i, 0)),
        out_shape=jax.ShapeDtypeStruct((Bp, out_size), f32),
        compiler_params=cp_apply,
        cost_estimate=pl.CostEstimate(
            flops=mm1_flops + mm2_flops,
            transcendentals=nt_total * (Hp + out_size),
            bytes_accessed=x_bytes + w_bytes + bn_bytes + Bp * out_size * 4),
    )(xp, w1p, s1, ss1, g1p, be1p, w2p, s2, ss2, g2p, be2p)

    return out_p if Bp == B else out_p[:B]


# ----------------------------------------------------------------------------
# References
# ----------------------------------------------------------------------------
def _reference_f32(x, w1, b1, g1, be1, w2, b2, g2, be2, eps=_EPS):
    """Full-f32 reference with biases (biases cancel under train-mode BN)."""
    h = x @ w1 + b1
    h = (h - h.mean(0)) / jnp.sqrt(h.var(0) + eps) * g1 + be1
    h = jnp.maximum(h, 0.0)
    o = h @ w2 + b2
    return (o - o.mean(0)) / jnp.sqrt(o.var(0) + eps) * g2 + be2


def _reference_mirrored(x, w1, g1, be1, w2, g2, be2, eps=_EPS):
    """Mirrors kernel numerics: bf16 MXU inputs, f32 accum, fused scale/shift BN."""
    bf16 = jnp.bfloat16
    h = jnp.dot(x.astype(bf16), w1.astype(bf16), preferred_element_type=jnp.float32)
    mu1 = h.mean(0)
    var1 = jnp.maximum((h * h).mean(0) - mu1 * mu1, 0.0)
    sc1 = g1 * lax.rsqrt(var1 + eps)
    sh1 = be1 - mu1 * sc1
    h = jnp.maximum(h * sc1 + sh1, 0.0)
    o = jnp.dot(h.astype(bf16), w2.astype(bf16), preferred_element_type=jnp.float32)
    mu2 = o.mean(0)
    var2 = jnp.maximum((o * o).mean(0) - mu2 * mu2, 0.0)
    sc2 = g2 * lax.rsqrt(var2 + eps)
    sh2 = be2 - mu2 * sc2
    return o * sc2 + sh2


# ----------------------------------------------------------------------------
if __name__ == "__main__":
    # Small shapes consistent with the module. (At this size the call is
    # launch-overhead dominated; the tiling pays off at real batch sizes.)
    batch, input_size, hidden_size, out_size = 8, 32, 64, 16

    key = jax.random.PRNGKey(0)
    kx, kw1, kb1, kw2, kb2, kg1, kbe1, kg2, kbe2 = jax.random.split(key, 9)

    x = jax.random.normal(kx, (batch, input_size), dtype=jnp.float32)

    lim1 = 1.0 / float(input_size) ** 0.5
    w1 = jax.random.uniform(kw1, (input_size, hidden_size), jnp.float32, -lim1, lim1)
    b1 = jax.random.uniform(kb1, (hidden_size,), jnp.float32, -lim1, lim1)

    lim2 = 1.0 / float(hidden_size) ** 0.5
    w2 = jax.random.uniform(kw2, (hidden_size, out_size), jnp.float32, -lim2, lim2)
    b2 = jax.random.uniform(kb2, (out_size,), jnp.float32, -lim2, lim2)

    g1 = 1.0 + 0.1 * jax.random.normal(kg1, (hidden_size,), jnp.float32)
    be1 = 0.1 * jax.random.normal(kbe1, (hidden_size,), jnp.float32)
    g2 = 1.0 + 0.1 * jax.random.normal(kg2, (out_size,), jnp.float32)
    be2 = 0.1 * jax.random.normal(kbe2, (out_size,), jnp.float32)

    forward = jax.jit(embedding_transform2)
    out = forward(x, w1, b1, g1, be1, w2, b2, g2, be2)
    out = jax.block_until_ready(out)
    assert out.shape == (batch, out_size)

    # Tight check against a reference that mirrors the kernel's numerics.
    ref_m = _reference_mirrored(x, w1, g1, be1, w2, g2, be2)
    assert jnp.allclose(out, ref_m, atol=5e-3, rtol=5e-3), "mismatch vs mirrored ref"

    # Loose check against the full-f32 reference (gap = bf16 MXU-input rounding).
    ref32 = _reference_f32(x, w1, b1, g1, be1, w2, b2, g2, be2)
    assert jnp.allclose(out, ref32, atol=1e-1, rtol=1e-1), "mismatch vs f32 ref"

    print("KERNEL_OK")
</pallas_src>

<mosaic_0001>
module attributes {stable_mosaic.version = 11 : i64} {
  func.func @_stats1_kernel(%arg0: i32, %arg1: i32, %arg2: memref<8x32xf32, #tpu.memory_space<vmem>>, %arg3: memref<32x128xbf16, #tpu.memory_space<vmem>>, %arg4: memref<1x1x128xf32, #tpu.memory_space<vmem>>, %arg5: memref<1x1x128xf32, #tpu.memory_space<vmem>>) attributes {dimension_semantics = [#tpu.dimension_semantics<parallel>, #tpu.dimension_semantics<arbitrary>], iteration_bounds = array<i64: 1, 1>, scalar_prefetch = 0 : i64, scratch_operands = 0 : i64, tpu.core_type = #tpu.core_type<tc>, window_params = [{transform_indices = @transform_0, window_bounds = array<i64: 8, 32>}, {pipeline_mode = #tpu.pipeline_mode<synchronous>, transform_indices = @transform_1, window_bounds = array<i64: 32, 128>}, {transform_indices = @transform_2, window_bounds = array<i64: 1, 1, 128>}, {transform_indices = @transform_3, window_bounds = array<i64: 1, 1, 128>}]} {
    %c0_i32 = arith.constant 0 : i32
    %0 = arith.cmpi eq, %arg1, %c0_i32 : i32
    %1 = arith.extui %0 : i1 to i32
    %c0_i32_0 = arith.constant 0 : i32
    %2 = arith.cmpi ne, %1, %c0_i32_0 : i32
    scf.if %2 {
      %cst_18 = arith.constant 0.000000e+00 : f32
      %20 = vector.broadcast %cst_18 : f32 to vector<1x1x128xf32>
      %c0_19 = arith.constant 0 : index
      %c0_20 = arith.constant 0 : index
      %c0_21 = arith.constant 0 : index
      %21 = vector.load %arg4[%c0_19, %c0_20, %c0_21] : memref<1x1x128xf32, #tpu.memory_space<vmem>>, vector<1x1x128xf32>
      tpu.vector_store %arg4[%c0_19, %c0_20, %c0_21], %20 {strides = array<i32>} : memref<1x1x128xf32, #tpu.memory_space<vmem>>, vector<1x1x128xf32>,
      %cst_22 = arith.constant 0.000000e+00 : f32
      %22 = vector.broadcast %cst_22 : f32 to vector<1x1x128xf32>
      %c0_23 = arith.constant 0 : index
      %c0_24 = arith.constant 0 : index
      %c0_25 = arith.constant 0 : index
      %23 = vector.load %arg5[%c0_23, %c0_24, %c0_25] : memref<1x1x128xf32, #tpu.memory_space<vmem>>, vector<1x1x128xf32>
      tpu.vector_store %arg5[%c0_23, %c0_24, %c0_25], %22 {strides = array<i32>} : memref<1x1x128xf32, #tpu.memory_space<vmem>>, vector<1x1x128xf32>,
    } else {
    }
    %c0 = arith.constant 0 : index
    %c0_1 = arith.constant 0 : index
    %3 = vector.load %arg2[%c0, %c0_1] : memref<8x32xf32, #tpu.memory_space<vmem>>, vector<8x32xf32>
    %4 = arith.truncf %3 : vector<8x32xf32> to vector<8x32xbf16>
    %c0_2 = arith.constant 0 : index
    %c0_3 = arith.constant 0 : index
    %5 = vector.load %arg3[%c0_2, %c0_3] : memref<32x128xbf16, #tpu.memory_space<vmem>>, vector<32x128xbf16>
    %cst = arith.constant dense<0.000000e+00> : vector<8x128xf32>
    %6 = tpu.matmul %4, %5, %cst {dimension_numbers = #tpu.dot_dimension_numbers<[1], [0], [0], [1], [0, 0, 1, 1], [], []>} : vector<8x32xbf16>, vector<32x128xbf16>, vector<8x128xf32> -> vector<8x128xf32>
    %c0_4 = arith.constant 0 : index
    %c0_5 = arith.constant 0 : index
    %c0_6 = arith.constant 0 : index
    %7 = vector.load %arg4[%c0_4, %c0_5, %c0_6] : memref<1x1x128xf32, #tpu.memory_space<vmem>>, vector<1x1x128xf32>
    %cst_7 = arith.constant dense<0.000000e+00> : vector<128xf32>
    %8 = vector.multi_reduction <add>, %6, %cst_7 [0] : vector<8x128xf32> to vector<128xf32>
    %9 = vector.shape_cast %8 : vector<128xf32> to vector<1x128xf32>
    %10 = vector.shape_cast %9 : vector<1x128xf32> to vector<1x1x128xf32>
    %11 = arith.addf %7, %10 : vector<1x1x128xf32>
    %c0_8 = arith.constant 0 : index
    %c0_9 = arith.constant 0 : index
    %c0_10 = arith.constant 0 : index
    %12 = vector.load %arg4[%c0_8, %c0_9, %c0_10] : memref<1x1x128xf32, #tpu.memory_space<vmem>>, vector<1x1x128xf32>
    tpu.vector_store %arg4[%c0_8, %c0_9, %c0_10], %11 {strides = array<i32>} : memref<1x1x128xf32, #tpu.memory_space<vmem>>, vector<1x1x128xf32>,
    %c0_11 = arith.constant 0 : index
    %c0_12 = arith.constant 0 : index
    %c0_13 = arith.constant 0 : index
    %13 = vector.load %arg5[%c0_11, %c0_12, %c0_13] : memref<1x1x128xf32, #tpu.memory_space<vmem>>, vector<1x1x128xf32>
    %14 = arith.mulf %6, %6 : vector<8x128xf32>
    %cst_14 = arith.constant dense<0.000000e+00> : vector<128xf32>
    %15 = vector.multi_reduction <add>, %14, %cst_14 [0] : vector<8x128xf32> to vector<128xf32>
    %16 = vector.shape_cast %15 : vector<128xf32> to vector<1x128xf32>
    %17 = vector.shape_cast %16 : vector<1x128xf32> to vector<1x1x128xf32>
    %18 = arith.addf %13, %17 : vector<1x1x128xf32>
    %c0_15 = arith.constant 0 : index
    %c0_16 = arith.constant 0 : index
    %c0_17 = arith.constant 0 : index
    %19 = vector.load %arg5[%c0_15, %c0_16, %c0_17] : memref<1x1x128xf32, #tpu.memory_space<vmem>>, vector<1x1x128xf32>
    tpu.vector_store %arg5[%c0_15, %c0_16, %c0_17], %18 {strides = array<i32>} : memref<1x1x128xf32, #tpu.memory_space<vmem>>, vector<1x1x128xf32>,
    return
  }
  func.func @transform_0(%arg0: i32, %arg1: i32) -> (i32, i32) {
    %c1_i32 = arith.constant 1 : i32
    %0 = arith.muli %arg0, %c1_i32 : i32
    %1 = arith.addi %0, %arg1 : i32
    %c0_i32 = arith.constant 0 : i32
    %c0_i32_0 = arith.constant 0 : i32
    return %1, %c0_i32 : i32, i32
  }
  func.func @transform_1(%arg0: i32, %arg1: i32) -> (i32, i32) {
    %c0_i32 = arith.constant 0 : i32
    %c0_i32_0 = arith.constant 0 : i32
    %c0_i32_1 = arith.constant 0 : i32
    return %c0_i32, %c0_i32_0 : i32, i32
  }
  func.func @transform_2(%arg0: i32, %arg1: i32) -> (i32, i32, i32) {
    %c0_i32 = arith.constant 0 : i32
    %c0_i32_0 = arith.constant 0 : i32
    %c0_i32_1 = arith.constant 0 : i32
    return %arg0, %c0_i32, %c0_i32_0 : i32, i32, i32
  }
  func.func @transform_3(%arg0: i32, %arg1: i32) -> (i32, i32, i32) {
    %c0_i32 = arith.constant 0 : i32
    %c0_i32_0 = arith.constant 0 : i32
    %c0_i32_1 = arith.constant 0 : i32
    return %arg0, %c0_i32, %c0_i32_0 : i32, i32, i32
  }
}

module attributes {stable_mosaic.version = 11 : i64} {
  func.func @_stats2_kernel(%arg0: i32, %arg1: i32, %arg2: memref<8x32xf32, #tpu.memory_space<vmem>>, %arg3: memref<32x128xbf16, #tpu.memory_space<vmem>>, %arg4: memref<1x1x128xf32, #tpu.memory_space<vmem>>, %arg5: memref<1x1x128xf32, #tpu.memory_space<vmem>>, %arg6: memref<1x128xf32, #tpu.memory_space<vmem>>, %arg7: memref<1x128xf32, #tpu.memory_space<vmem>>, %arg8: memref<128x16xbf16, #tpu.memory_space<vmem>>, %arg9: memref<1x1x16xf32, #tpu.memory_space<vmem>>, %arg10: memref<1x1x16xf32, #tpu.memory_space<vmem>>) attributes {dimension_semantics = [#tpu.dimension_semantics<parallel>, #tpu.dimension_semantics<arbitrary>], iteration_bounds = array<i64: 1, 1>, scalar_prefetch = 0 : i64, scratch_operands = 0 : i64, tpu.core_type = #tpu.core_type<tc>, window_params = [{transform_indices = @transform_0, window_bounds = array<i64: 8, 32>}, {pipeline_mode = #tpu.pipeline_mode<synchronous>, transform_indices = @transform_1, window_bounds = array<i64: 32, 128>}, {pipeline_mode = #tpu.pipeline_mode<synchronous>, transform_indices = @transform_2, window_bounds = array<i64: 1, 1, 128>}, {pipeline_mode = #tpu.pipeline_mode<synchronous>, transform_indices = @transform_3, window_bounds = array<i64: 1, 1, 128>}, {pipeline_mode = #tpu.pipeline_mode<synchronous>, transform_indices = @transform_4, window_bounds = array<i64: 1, 128>}, {pipeline_mode = #tpu.pipeline_mode<synchronous>, transform_indices = @transform_5, window_bounds = array<i64: 1, 128>}, {pipeline_mode = #tpu.pipeline_mode<synchronous>, transform_indices = @transform_6, window_bounds = array<i64: 128, 16>}, {transform_indices = @transform_7, window_bounds = array<i64: 1, 1, 16>}, {transform_indices = @transform_8, window_bounds = array<i64: 1, 1, 16>}]} {
    %c0_i32 = arith.constant 0 : i32
    %0 = arith.cmpi eq, %arg1, %c0_i32 : i32
    %1 = arith.extui %0 : i1 to i32
    %c0_i32_0 = arith.constant 0 : i32
    %2 = arith.cmpi ne, %1, %c0_i32_0 : i32
    scf.if %2 {
      %cst_40 = arith.constant 0.000000e+00 : f32
      %61 = vector.broadcast %cst_40 : f32 to vector<1x1x16xf32>
      %c0_41 = arith.constant 0 : index
      %c0_42 = arith.constant 0 : index
      %c0_43 = arith.constant 0 : index
      %62 = vector.load %arg9[%c0_41, %c0_42, %c0_43] : memref<1x1x16xf32, #tpu.memory_space<vmem>>, vector<1x1x16xf32>
      tpu.vector_store %arg9[%c0_41, %c0_42, %c0_43], %61 {strides = array<i32>} : memref<1x1x16xf32, #tpu.memory_space<vmem>>, vector<1x1x16xf32>,
      %cst_44 = arith.constant 0.000000e+00 : f32
      %63 = vector.broadcast %cst_44 : f32 to vector<1x1x16xf32>
      %c0_45 = arith.constant 0 : index
      %c0_46 = arith.constant 0 : index
      %c0_47 = arith.constant 0 : index
      %64 = vector.load %arg10[%c0_45, %c0_46, %c0_47] : memref<1x1x16xf32, #tpu.memory_space<vmem>>, vector<1x1x16xf32>
      tpu.vector_store %arg10[%c0_45, %c0_46, %c0_47], %63 {strides = array<i32>} : memref<1x1x16xf32, #tpu.memory_space<vmem>>, vector<1x1x16xf32>,
    } else {
    }
    %c0 = arith.constant 0 : index
    %c0_1 = arith.constant 0 : index
    %c0_2 = arith.constant 0 : index
    %3 = vector.load %arg4[%c0, %c0_1, %c0_2] : memref<1x1x128xf32, #tpu.memory_space<vmem>>, vector<1x1x128xf32>
    %cst = arith.constant dense<0.000000e+00> : vector<1x128xf32>
    %4 = vector.multi_reduction <add>, %3, %cst [0] : vector<1x1x128xf32> to vector<1x128xf32>
    %c0_3 = arith.constant 0 : index
    %c0_4 = arith.constant 0 : index
    %c0_5 = arith.constant 0 : index
    %5 = vector.load %arg5[%c0_3, %c0_4, %c0_5] : memref<1x1x128xf32, #tpu.memory_space<vmem>>, vector<1x1x128xf32>
    %cst_6 = arith.constant dense<0.000000e+00> : vector<1x128xf32>
    %6 = vector.multi_reduction <add>, %5, %cst_6 [0] : vector<1x1x128xf32> to vector<1x128xf32>
    %cst_7 = arith.constant 1.250000e-01 : f32
    %7 = vector.broadcast %cst_7 : f32 to vector<1x128xf32>
    %8 = arith.mulf %4, %7 : vector<1x128xf32>
    %cst_8 = arith.constant 1.250000e-01 : f32
    %9 = vector.broadcast %cst_8 : f32 to vector<1x128xf32>
    %10 = arith.mulf %6, %9 : vector<1x128xf32>
    %11 = arith.mulf %8, %8 : vector<1x128xf32>
    %12 = arith.subf %10, %11 : vector<1x128xf32>
    %cst_9 = arith.constant 0.000000e+00 : f32
    %13 = vector.broadcast %cst_9 : f32 to vector<1x128xf32>
    %14 = arith.maximumf %12, %13 : vector<1x128xf32>
    %c0_10 = arith.constant 0 : index
    %c0_11 = arith.constant 0 : index
    %15 = vector.load %arg6[%c0_10, %c0_11] : memref<1x128xf32, #tpu.memory_space<vmem>>, vector<1x128xf32>
    %cst_12 = arith.constant 9.99999974E-6 : f32
    %16 = vector.broadcast %cst_12 : f32 to vector<1x128xf32>
    %17 = arith.addf %14, %16 : vector<1x128xf32>
    %18 = math.rsqrt %17 : vector<1x128xf32>
    %19 = arith.mulf %15, %18 : vector<1x128xf32>
    %c0_13 = arith.constant 0 : index
    %c0_14 = arith.constant 0 : index
    %20 = vector.load %arg7[%c0_13, %c0_14] : memref<1x128xf32, #tpu.memory_space<vmem>>, vector<1x128xf32>
    %21 = arith.mulf %8, %19 : vector<1x128xf32>
    %22 = arith.subf %20, %21 : vector<1x128xf32>
    %c0_15 = arith.constant 0 : index
    %c0_16 = arith.constant 0 : index
    %23 = vector.load %arg2[%c0_15, %c0_16] : memref<8x32xf32, #tpu.memory_space<vmem>>, vector<8x32xf32>
    %24 = arith.truncf %23 : vector<8x32xf32> to vector<8x32xbf16>
    %c0_17 = arith.constant 0 : index
    %c0_18 = arith.constant 0 : index
    %25 = vector.load %arg3[%c0_17, %c0_18] : memref<32x128xbf16, #tpu.memory_space<vmem>>, vector<32x128xbf16>
    %cst_19 = arith.constant dense<0.000000e+00> : vector<8x128xf32>
    %26 = tpu.matmul %24, %25, %cst_19 {dimension_numbers = #tpu.dot_dimension_numbers<[1], [0], [0], [1], [0, 0, 1, 1], [], []>} : vector<8x32xbf16>, vector<32x128xbf16>, vector<8x128xf32> -> vector<8x128xf32>
    %27 = vector.broadcast %19 : vector<1x128xf32> to vector<8x128xf32>
    %28 = arith.mulf %26, %27 : vector<8x128xf32>
    %29 = vector.broadcast %22 : vector<1x128xf32> to vector<8x128xf32>
    %30 = arith.addf %28, %29 : vector<8x128xf32>
    %cst_20 = arith.constant 0.000000e+00 : f32
    %31 = vector.broadcast %cst_20 : f32 to vector<8x128xf32>
    %32 = arith.maximumf %30, %31 : vector<8x128xf32>
    %33 = arith.truncf %32 : vector<8x128xf32> to vector<8x128xbf16>
    %c0_21 = arith.constant 0 : index
    %c0_22 = arith.constant 0 : index
    %34 = vector.load %arg8[%c0_21, %c0_22] : memref<128x16xbf16, #tpu.memory_space<vmem>>, vector<128x16xbf16>
    %cst_23 = arith.constant dense<0.000000e+00> : vector<8x16xf32>
    %35 = tpu.matmul %33, %34, %cst_23 {dimension_numbers = #tpu.dot_dimension_numbers<[1], [0], [0], [1], [0, 0, 1, 1], [], []>} : vector<8x128xbf16>, vector<128x16xbf16>, vector<8x16xf32> -> vector<8x16xf32>
    %c1_i32 = arith.constant 1 : i32
    %36 = arith.muli %arg0, %c1_i32 : i32
    %37 = arith.addi %36, %arg1 : i32
    %c8_i32 = arith.constant 8 : i32
    %38 = arith.muli %37, %c8_i32 : i32
    %39 = tpu.iota {dimensions = array<i32: 0>} : vector<8x1xi32>
    %40 = vector.broadcast %38 : i32 to vector<8x1xi32>
    %41 = arith.addi %40, %39 : vector<8x1xi32>
    %c8_i32_24 = arith.constant 8 : i32
    %42 = vector.broadcast %c8_i32_24 : i32 to vector<8x1xi32>
    %43 = arith.cmpi slt, %41, %42 : vector<8x1xi32>
    %cst_25 = arith.constant 0.000000e+00 : f32
    %44 = vector.shape_cast %43 : vector<8x1xi1> to vector<8x1xi1>
    %45 = vector.broadcast %44 : vector<8x1xi1> to vector<8x16xi1>
    %46 = vector.broadcast %cst_25 : f32 to vector<8x16xf32>
    %47 = arith.select %45, %35, %46 : vector<8x16xi1>, vector<8x16xf32>
    %c0_26 = arith.constant 0 : index
    %c0_27 = arith.constant 0 : index
    %c0_28 = arith.constant 0 : index
    %48 = vector.load %arg9[%c0_26, %c0_27, %c0_28] : memref<1x1x16xf32, #tpu.memory_space<vmem>>, vector<1x1x16xf32>
    %cst_29 = arith.constant dense<0.000000e+00> : vector<16xf32>
    %49 = vector.multi_reduction <add>, %47, %cst_29 [0] : vector<8x16xf32> to vector<16xf32>
    %50 = vector.shape_cast %49 : vector<16xf32> to vector<1x16xf32>
    %51 = vector.shape_cast %50 : vector<1x16xf32> to vector<1x1x16xf32>
    %52 = arith.addf %48, %51 : vector<1x1x16xf32>
    %c0_30 = arith.constant 0 : index
    %c0_31 = arith.constant 0 : index
    %c0_32 = arith.constant 0 : index
    %53 = vector.load %arg9[%c0_30, %c0_31, %c0_32] : memref<1x1x16xf32, #tpu.memory_space<vmem>>, vector<1x1x16xf32>
    tpu.vector_store %arg9[%c0_30, %c0_31, %c0_32], %52 {strides = array<i32>} : memref<1x1x16xf32, #tpu.memory_space<vmem>>, vector<1x1x16xf32>,
    %c0_33 = arith.constant 0 : index
    %c0_34 = arith.constant 0 : index
    %c0_35 = arith.constant 0 : index
    %54 = vector.load %arg10[%c0_33, %c0_34, %c0_35] : memref<1x1x16xf32, #tpu.memory_space<vmem>>, vector<1x1x16xf32>
    %55 = arith.mulf %47, %47 : vector<8x16xf32>
    %cst_36 = arith.constant dense<0.000000e+00> : vector<16xf32>
    %56 = vector.multi_reduction <add>, %55, %cst_36 [0] : vector<8x16xf32> to vector<16xf32>
    %57 = vector.shape_cast %56 : vector<16xf32> to vector<1x16xf32>
    %58 = vector.shape_cast %57 : vector<1x16xf32> to vector<1x1x16xf32>
    %59 = arith.addf %54, %58 : vector<1x1x16xf32>
    %c0_37 = arith.constant 0 : index
    %c0_38 = arith.constant 0 : index
    %c0_39 = arith.constant 0 : index
    %60 = vector.load %arg10[%c0_37, %c0_38, %c0_39] : memref<1x1x16xf32, #tpu.memory_space<vmem>>, vector<1x1x16xf32>
    tpu.vector_store %arg10[%c0_37, %c0_38, %c0_39], %59 {strides = array<i32>} : memref<1x1x16xf32, #tpu.memory_space<vmem>>, vector<1x1x16xf32>,
    return
  }
  func.func @transform_0(%arg0: i32, %arg1: i32) -> (i32, i32) {
    %c1_i32 = arith.constant 1 : i32
    %0 = arith.muli %arg0, %c1_i32 : i32
    %1 = arith.addi %0, %arg1 : i32
    %c0_i32 = arith.constant 0 : i32
    %c0_i32_0 = arith.constant 0 : i32
    return %1, %c0_i32 : i32, i32
  }
  func.func @transform_1(%arg0: i32, %arg1: i32) -> (i32, i32) {
    %c0_i32 = arith.constant 0 : i32
    %c0_i32_0 = arith.constant 0 : i32
    %c0_i32_1 = arith.constant 0 : i32
    return %c0_i32, %c0_i32_0 : i32, i32
  }
  func.func @transform_2(%arg0: i32, %arg1: i32) -> (i32, i32, i32) {
    %c0_i32 = arith.constant 0 : i32
    %c0_i32_0 = arith.constant 0 : i32
    %c0_i32_1 = arith.constant 0 : i32
    %c0_i32_2 = arith.constant 0 : i32
    return %c0_i32, %c0_i32_0, %c0_i32_1 : i32, i32, i32
  }
  func.func @transform_3(%arg0: i32, %arg1: i32) -> (i32, i32, i32) {
    %c0_i32 = arith.constant 0 : i32
    %c0_i32_0 = arith.constant 0 : i32
    %c0_i32_1 = arith.constant 0 : i32
    %c0_i32_2 = arith.constant 0 : i32
    return %c0_i32, %c0_i32_0, %c0_i32_1 : i32, i32, i32
  }
  func.func @transform_4(%arg0: i32, %arg1: i32) -> (i32, i32) {
    %c0_i32 = arith.constant 0 : i32
    %c0_i32_0 = arith.constant 0 : i32
    %c0_i32_1 = arith.constant 0 : i32
    return %c0_i32, %c0_i32_0 : i32, i32
  }
  func.func @transform_5(%arg0: i32, %arg1: i32) -> (i32, i32) {
    %c0_i32 = arith.constant 0 : i32
    %c0_i32_0 = arith.constant 0 : i32
    %c0_i32_1 = arith.constant 0 : i32
    return %c0_i32, %c0_i32_0 : i32, i32
  }
  func.func @transform_6(%arg0: i32, %arg1: i32) -> (i32, i32) {
    %c0_i32 = arith.constant 0 : i32
    %c0_i32_0 = arith.constant 0 : i32
    %c0_i32_1 = arith.constant 0 : i32
    return %c0_i32, %c0_i32_0 : i32, i32
  }
  func.func @transform_7(%arg0: i32, %arg1: i32) -> (i32, i32, i32) {
    %c0_i32 = arith.constant 0 : i32
    %c0_i32_0 = arith.constant 0 : i32
    %c0_i32_1 = arith.constant 0 : i32
    return %arg0, %c0_i32, %c0_i32_0 : i32, i32, i32
  }
  func.func @transform_8(%arg0: i32, %arg1: i32) -> (i32, i32, i32) {
    %c0_i32 = arith.constant 0 : i32
    %c0_i32_0 = arith.constant 0 : i32
    %c0_i32_1 = arith.constant 0 : i32
    return %arg0, %c0_i32, %c0_i32_0 : i32, i32, i32
  }
}

module attributes {stable_mosaic.version = 11 : i64} {
  func.func @_apply_kernel(%arg0: i32, %arg1: memref<8x32xf32, #tpu.memory_space<vmem>>, %arg2: memref<32x128xbf16, #tpu.memory_space<vmem>>, %arg3: memref<1x1x128xf32, #tpu.memory_space<vmem>>, %arg4: memref<1x1x128xf32, #tpu.memory_space<vmem>>, %arg5: memref<1x128xf32, #tpu.memory_space<vmem>>, %arg6: memref<1x128xf32, #tpu.memory_space<vmem>>, %arg7: memref<128x16xbf16, #tpu.memory_space<vmem>>, %arg8: memref<1x1x16xf32, #tpu.memory_space<vmem>>, %arg9: memref<1x1x16xf32, #tpu.memory_space<vmem>>, %arg10: memref<1x16xf32, #tpu.memory_space<vmem>>, %arg11: memref<1x16xf32, #tpu.memory_space<vmem>>, %arg12: memref<8x16xf32, #tpu.memory_space<vmem>>) attributes {dimension_semantics = [#tpu.dimension_semantics<parallel>], iteration_bounds = array<i64: 1>, scalar_prefetch = 0 : i64, scratch_operands = 0 : i64, tpu.core_type = #tpu.core_type<tc>, window_params = [{transform_indices = @transform_0, window_bounds = array<i64: 8, 32>}, {pipeline_mode = #tpu.pipeline_mode<synchronous>, transform_indices = @transform_1, window_bounds = array<i64: 32, 128>}, {pipeline_mode = #tpu.pipeline_mode<synchronous>, transform_indices = @transform_2, window_bounds = array<i64: 1, 1, 128>}, {pipeline_mode = #tpu.pipeline_mode<synchronous>, transform_indices = @transform_3, window_bounds = array<i64: 1, 1, 128>}, {pipeline_mode = #tpu.pipeline_mode<synchronous>, transform_indices = @transform_4, window_bounds = array<i64: 1, 128>}, {pipeline_mode = #tpu.pipeline_mode<synchronous>, transform_indices = @transform_5, window_bounds = array<i64: 1, 128>}, {pipeline_mode = #tpu.pipeline_mode<synchronous>, transform_indices = @transform_6, window_bounds = array<i64: 128, 16>}, {pipeline_mode = #tpu.pipeline_mode<synchronous>, transform_indices = @transform_7, window_bounds = array<i64: 1, 1, 16>}, {pipeline_mode = #tpu.pipeline_mode<synchronous>, transform_indices = @transform_8, window_bounds = array<i64: 1, 1, 16>}, {pipeline_mode = #tpu.pipeline_mode<synchronous>, transform_indices = @transform_9, window_bounds = array<i64: 1, 16>}, {pipeline_mode = #tpu.pipeline_mode<synchronous>, transform_indices = @transform_10, window_bounds = array<i64: 1, 16>}, {transform_indices = @transform_11, window_bounds = array<i64: 8, 16>}]} {
    %c0 = arith.constant 0 : index
    %c0_0 = arith.constant 0 : index
    %c0_1 = arith.constant 0 : index
    %0 = vector.load %arg3[%c0, %c0_0, %c0_1] : memref<1x1x128xf32, #tpu.memory_space<vmem>>, vector<1x1x128xf32>
    %cst = arith.constant dense<0.000000e+00> : vector<1x128xf32>
    %1 = vector.multi_reduction <add>, %0, %cst [0] : vector<1x1x128xf32> to vector<1x128xf32>
    %c0_2 = arith.constant 0 : index
    %c0_3 = arith.constant 0 : index
    %c0_4 = arith.constant 0 : index
    %2 = vector.load %arg4[%c0_2, %c0_3, %c0_4] : memref<1x1x128xf32, #tpu.memory_space<vmem>>, vector<1x1x128xf32>
    %cst_5 = arith.constant dense<0.000000e+00> : vector<1x128xf32>
    %3 = vector.multi_reduction <add>, %2, %cst_5 [0] : vector<1x1x128xf32> to vector<1x128xf32>
    %cst_6 = arith.constant 1.250000e-01 : f32
    %4 = vector.broadcast %cst_6 : f32 to vector<1x128xf32>
    %5 = arith.mulf %1, %4 : vector<1x128xf32>
    %cst_7 = arith.constant 1.250000e-01 : f32
    %6 = vector.broadcast %cst_7 : f32 to vector<1x128xf32>
    %7 = arith.mulf %3, %6 : vector<1x128xf32>
    %8 = arith.mulf %5, %5 : vector<1x128xf32>
    %9 = arith.subf %7, %8 : vector<1x128xf32>
    %cst_8 = arith.constant 0.000000e+00 : f32
    %10 = vector.broadcast %cst_8 : f32 to vector<1x128xf32>
    %11 = arith.maximumf %9, %10 : vector<1x128xf32>
    %c0_9 = arith.constant 0 : index
    %c0_10 = arith.constant 0 : index
    %12 = vector.load %arg5[%c0_9, %c0_10] : memref<1x128xf32, #tpu.memory_space<vmem>>, vector<1x128xf32>
    %cst_11 = arith.constant 9.99999974E-6 : f32
    %13 = vector.broadcast %cst_11 : f32 to vector<1x128xf32>
    %14 = arith.addf %11, %13 : vector<1x128xf32>
    %15 = math.rsqrt %14 : vector<1x128xf32>
    %16 = arith.mulf %12, %15 : vector<1x128xf32>
    %c0_12 = arith.constant 0 : index
    %c0_13 = arith.constant 0 : index
    %17 = vector.load %arg6[%c0_12, %c0_13] : memref<1x128xf32, #tpu.memory_space<vmem>>, vector<1x128xf32>
    %18 = arith.mulf %5, %16 : vector<1x128xf32>
    %19 = arith.subf %17, %18 : vector<1x128xf32>
    %c0_14 = arith.constant 0 : index
    %c0_15 = arith.constant 0 : index
    %c0_16 = arith.constant 0 : index
    %20 = vector.load %arg8[%c0_14, %c0_15, %c0_16] : memref<1x1x16xf32, #tpu.memory_space<vmem>>, vector<1x1x16xf32>
    %cst_17 = arith.constant dense<0.000000e+00> : vector<1x16xf32>
    %21 = vector.multi_reduction <add>, %20, %cst_17 [0] : vector<1x1x16xf32> to vector<1x16xf32>
    %c0_18 = arith.constant 0 : index
    %c0_19 = arith.constant 0 : index
    %c0_20 = arith.constant 0 : index
    %22 = vector.load %arg9[%c0_18, %c0_19, %c0_20] : memref<1x1x16xf32, #tpu.memory_space<vmem>>, vector<1x1x16xf32>
    %cst_21 = arith.constant dense<0.000000e+00> : vector<1x16xf32>
    %23 = vector.multi_reduction <add>, %22, %cst_21 [0] : vector<1x1x16xf32> to vector<1x16xf32>
    %cst_22 = arith.constant 1.250000e-01 : f32
    %24 = vector.broadcast %cst_22 : f32 to vector<1x16xf32>
    %25 = arith.mulf %21, %24 : vector<1x16xf32>
    %cst_23 = arith.constant 1.250000e-01 : f32
    %26 = vector.broadcast %cst_23 : f32 to vector<1x16xf32>
    %27 = arith.mulf %23, %26 : vector<1x16xf32>
    %28 = arith.mulf %25, %25 : vector<1x16xf32>
    %29 = arith.subf %27, %28 : vector<1x16xf32>
    %cst_24 = arith.constant 0.000000e+00 : f32
    %30 = vector.broadcast %cst_24 : f32 to vector<1x16xf32>
    %31 = arith.maximumf %29, %30 : vector<1x16xf32>
    %c0_25 = arith.constant 0 : index
    %c0_26 = arith.constant 0 : index
    %32 = vector.load %arg10[%c0_25, %c0_26] : memref<1x16xf32, #tpu.memory_space<vmem>>, vector<1x16xf32>
    %cst_27 = arith.constant 9.99999974E-6 : f32
    %33 = vector.broadcast %cst_27 : f32 to vector<1x16xf32>
    %34 = arith.addf %31, %33 : vector<1x16xf32>
    %35 = math.rsqrt %34 : vector<1x16xf32>
    %36 = arith.mulf %32, %35 : vector<1x16xf32>
    %c0_28 = arith.constant 0 : index
    %c0_29 = arith.constant 0 : index
    %37 = vector.load %arg11[%c0_28, %c0_29] : memref<1x16xf32, #tpu.memory_space<vmem>>, vector<1x16xf32>
    %38 = arith.mulf %25, %36 : vector<1x16xf32>
    %39 = arith.subf %37, %38 : vector<1x16xf32>
    %c0_30 = arith.constant 0 : index
    %c0_31 = arith.constant 0 : index
    %40 = vector.load %arg1[%c0_30, %c0_31] : memref<8x32xf32, #tpu.memory_space<vmem>>, vector<8x32xf32>
    %41 = arith.truncf %40 : vector<8x32xf32> to vector<8x32xbf16>
    %c0_32 = arith.constant 0 : index
    %c0_33 = arith.constant 0 : index
    %42 = vector.load %arg2[%c0_32, %c0_33] : memref<32x128xbf16, #tpu.memory_space<vmem>>, vector<32x128xbf16>
    %cst_34 = arith.constant dense<0.000000e+00> : vector<8x128xf32>
    %43 = tpu.matmul %41, %42, %cst_34 {dimension_numbers = #tpu.dot_dimension_numbers<[1], [0], [0], [1], [0, 0, 1, 1], [], []>} : vector<8x32xbf16>, vector<32x128xbf16>, vector<8x128xf32> -> vector<8x128xf32>
    %44 = vector.broadcast %16 : vector<1x128xf32> to vector<8x128xf32>
    %45 = arith.mulf %43, %44 : vector<8x128xf32>
    %46 = vector.broadcast %19 : vector<1x128xf32> to vector<8x128xf32>
    %47 = arith.addf %45, %46 : vector<8x128xf32>
    %cst_35 = arith.constant 0.000000e+00 : f32
    %48 = vector.broadcast %cst_35 : f32 to vector<8x128xf32>
    %49 = arith.maximumf %47, %48 : vector<8x128xf32>
    %50 = arith.truncf %49 : vector<8x128xf32> to vector<8x128xbf16>
    %c0_36 = arith.constant 0 : index
    %c0_37 = arith.constant 0 : index
    %51 = vector.load %arg7[%c0_36, %c0_37] : memref<128x16xbf16, #tpu.memory_space<vmem>>, vector<128x16xbf16>
    %cst_38 = arith.constant dense<0.000000e+00> : vector<8x16xf32>
    %52 = tpu.matmul %50, %51, %cst_38 {dimension_numbers = #tpu.dot_dimension_numbers<[1], [0], [0], [1], [0, 0, 1, 1], [], []>} : vector<8x128xbf16>, vector<128x16xbf16>, vector<8x16xf32> -> vector<8x16xf32>
    %53 = vector.broadcast %36 : vector<1x16xf32> to vector<8x16xf32>
    %54 = arith.mulf %52, %53 : vector<8x16xf32>
    %55 = vector.broadcast %39 : vector<1x16xf32> to vector<8x16xf32>
    %56 = arith.addf %54, %55 : vector<8x16xf32>
    %c0_39 = arith.constant 0 : index
    %c0_40 = arith.constant 0 : index
    %57 = vector.load %arg12[%c0_39, %c0_40] : memref<8x16xf32, #tpu.memory_space<vmem>>, vector<8x16xf32>
    tpu.vector_store %arg12[%c0_39, %c0_40], %56 {strides = array<i32>} : memref<8x16xf32, #tpu.memory_space<vmem>>, vector<8x16xf32>,
    return
  }
  func.func @transform_0(%arg0: i32) -> (i32, i32) {
    %c0_i32 = arith.constant 0 : i32
    %c0_i32_0 = arith.constant 0 : i32
    return %arg0, %c0_i32 : i32, i32
  }
  func.func @transform_1(%arg0: i32) -> (i32, i32) {
    %c0_i32 = arith.constant 0 : i32
    %c0_i32_0 = arith.constant 0 : i32
    %c0_i32_1 = arith.constant 0 : i32
    return %c0_i32, %c0_i32_0 : i32, i32
  }
  func.func @transform_2(%arg0: i32) -> (i32, i32, i32) {
    %c0_i32 = arith.constant 0 : i32
    %c0_i32_0 = arith.constant 0 : i32
    %c0_i32_1 = arith.constant 0 : i32
    %c0_i32_2 = arith.constant 0 : i32
    return %c0_i32, %c0_i32_0, %c0_i32_1 : i32, i32, i32
  }
  func.func @transform_3(%arg0: i32) -> (i32, i32, i32) {
    %c0_i32 = arith.constant 0 : i32
    %c0_i32_0 = arith.constant 0 : i32
    %c0_i32_1 = arith.constant 0 : i32
    %c0_i32_2 = arith.constant 0 : i32
    return %c0_i32, %c0_i32_0, %c0_i32_1 : i32, i32, i32
  }
  func.func @transform_4(%arg0: i32) -> (i32, i32) {
    %c0_i32 = arith.constant 0 : i32
    %c0_i32_0 = arith.constant 0 : i32
    %c0_i32_1 = arith.constant 0 : i32
    return %c0_i32, %c0_i32_0 : i32, i32
  }
  func.func @transform_5(%arg0: i32) -> (i32, i32) {
    %c0_i32 = arith.constant 0 : i32
    %c0_i32_0 = arith.constant 0 : i32
    %c0_i32_1 = arith.constant 0 : i32
    return %c0_i32, %c0_i32_0 : i32, i32
  }
  func.func @transform_6(%arg0: i32) -> (i32, i32) {
    %c0_i32 = arith.constant 0 : i32
    %c0_i32_0 = arith.constant 0 : i32
    %c0_i32_1 = arith.constant 0 : i32
    return %c0_i32, %c0_i32_0 : i32, i32
  }
  func.func @transform_7(%arg0: i32) -> (i32, i32, i32) {
    %c0_i32 = arith.constant 0 : i32
    %c0_i32_0 = arith.constant 0 : i32
    %c0_i32_1 = arith.constant 0 : i32
    %c0_i32_2 = arith.constant 0 : i32
    return %c0_i32, %c0_i32_0, %c0_i32_1 : i32, i32, i32
  }
  func.func @transform_8(%arg0: i32) -> (i32, i32, i32) {
    %c0_i32 = arith.constant 0 : i32
    %c0_i32_0 = arith.constant 0 : i32
    %c0_i32_1 = arith.constant 0 : i32
    %c0_i32_2 = arith.constant 0 : i32
    return %c0_i32, %c0_i32_0, %c0_i32_1 : i32, i32, i32
  }
  func.func @transform_9(%arg0: i32) -> (i32, i32) {
    %c0_i32 = arith.constant 0 : i32
    %c0_i32_0 = arith.constant 0 : i32
    %c0_i32_1 = arith.constant 0 : i32
    return %c0_i32, %c0_i32_0 : i32, i32
  }
  func.func @transform_10(%arg0: i32) -> (i32, i32) {
    %c0_i32 = arith.constant 0 : i32
    %c0_i32_0 = arith.constant 0 : i32
    %c0_i32_1 = arith.constant 0 : i32
    return %c0_i32, %c0_i32_0 : i32, i32
  }
  func.func @transform_11(%arg0: i32) -> (i32, i32) {
    %c0_i32 = arith.constant 0 : i32
    %c0_i32_0 = arith.constant 0 : i32
    return %arg0, %c0_i32 : i32, i32
  }
}

</mosaic_0001>

<llo_original>
// kernel: embedding_transform2.3
$region0: #{embedding_transform2.3}
  #allocation0 [shape = 'u32[]', space=smem, size = 0x4, offset = 0x4, fixed_abs, tag = 'smem constant byte address 0x4 - core index']
  #allocation1 [shape = 'u32[144,128]{1,0:T(1,128)}', space=vmem, size = 0x12000, scoped, tag = 'internal scratch']
  %s0 = inlined_call_operand.vmem [shape: f32[8,32], index: 0, kind: input, shape index: {}]
  %s1 = inlined_call_operand.vmem [shape: bf16[32,128], index: 1, kind: input, shape index: {}]
  %s2 = inlined_call_operand.vmem [shape: f32[1,1,128], index: 2, kind: output, shape index: {0}]
  %s3 = inlined_call_operand.vmem [shape: f32[1,1,128], index: 3, kind: output, shape index: {1}]
  %4 = xla_tuple %s2, %s3
  %s5 = sld [smem:[#allocation0]]
  $region30: #{embedding_transform2.3} parent=0
    _
  %s7 = ssub.s32 1, %s5
  %s8 = scalar_select 0, %s7, %s5
  // Predicated region
  $region2: #{embedding_transform2.3} parent=0 // pred_check
    _
  $region3: #{embedding_transform2.3} parent=0 // pred_check_branch
    %10 = sbr.rel (0) target = $region5
  $region4: #{embedding_transform2.3} parent=0 // pred_region
    %s11 = sadd.s32 0, 0
    %p12 = scmp.lt.s32.totalorder %s11, 0
    %s13 = scalar_select %p12, %s11, 0
    %s14 = smul.addr %s13, 8
    %s15 = scalar_lea.vmem %s0, %s14
    %s16 = sadd.s32 0, 0
  $region5: #{embedding_transform2.3} parent=0 // pred_fallthru
    _
  // Predicated region
  $region6: #{embedding_transform2.3} parent=0 // pred_check
    _
  $region7: #{embedding_transform2.3} parent=0 // pred_check_branch
    %18 = sbr.rel (0) target = $region9
  $region8: #{embedding_transform2.3} parent=0 // pred_region
    _
  $region9: #{embedding_transform2.3} parent=0 // pred_fallthru
    _
  %s19 = sadd.s32 0, 0
  %p20 = scmp.lt.s32.totalorder %s19, 0
  %s21 = scalar_select %p20, %s19, 0
  %s22 = smul.addr %s21, 8
  %s23 = scalar_lea.vmem %s0, %s22
  %s24 = sadd.s32 0, 0
  %p25 = scmp.lt.s32.totalorder %s24, 0
  %s26 = scalar_select %p25, %s24, 0
  %s27 = smul.addr %s26, 8
  %s28 = scalar_lea.vmem %s0, %s27
  %s29 = sadd.s32 0, 0
  %p31 = scmp.eq.s32.totalorder 0, 0
  // Predicated region
  $region10: #{embedding_transform2.3} parent=0 // pred_check
    %p32 = pneg %p31
  $region11: #{embedding_transform2.3} parent=0 // pred_check_branch
    %34 = sbr.rel (%p32) target = $region13
  $region12: #{embedding_transform2.3} parent=0 // pred_region
    %35 = vst [vmem:[%s2] sm:$0x1] 0.0
    %36 = vst [vmem:[%s3] sm:$0x1] 0.0
  $region13: #{embedding_transform2.3} parent=0 // pred_fallthru
    _
  %v37 = vld [vmem:[%s28] sm:$0xff]
  %v38 = vpack.c.bf16 %v37, %v37
  %v39 = vld [vmem:[%s1] sm:$0xf]
  %v40 = vld [vmem:[%s1 + $0x4] sm:$0xf]
  %v41 = vld [vmem:[%s1 + $0x8] sm:$0xf]
  %v42 = vld [vmem:[%s1 + $0xc] sm:$0xf]
  %v47 = vunpack.c.l.b16 %v39
  %v48 = vunpack.c.l.b16 %v40
  %v49 = vunpack.c.l.b16 %v41
  %v50 = vunpack.c.l.b16 %v42
  %v51 = vpack.c.b16 %v48, %v47
  %v52 = vpack.c.b16 %v50, %v49
  %vm55 = vcmask 261120
  %v57 = vsel %vm55, %v38, 0
  %59 = vmatprep.subr.bf16.mxu0 0
  %60 = vmatpush1.bf16.msra.mxu0 %v51
  %61 = vmatprep.subr.bf16.mxu0 0
  %62 = vmatpush1.bf16.msra.mxu0 %v52
  %63 = vmatprep.subr.bf16.mxu0 0
  %64 = vmatpush1.bf16.msra.mxu0 0
  %65 = vmatprep.subr.bf16.mxu0 0
  %66 = vmatpush1.bf16.msra.mxu0 0
  %67 = vmatprep.subr.bf16.mxu0 0
  %68 = vmatpush1.bf16.msra.mxu0 0
  %69 = vmatprep.subr.bf16.mxu0 0
  %70 = vmatpush1.bf16.msra.mxu0 0
  %71 = vmatprep.subr.bf16.mxu0 0
  %72 = vmatpush1.bf16.msra.mxu0 0
  %73 = vmatprep.subr.bf16.mxu0 0
  %74 = vmatpush1.bf16.msra.mxu0 0
  %75 = vmatprep.subr.bf16.mxu0 0
  %76 = vmatpush1.bf16.msra.mxu0 0
  %77 = vmatprep.subr.bf16.mxu0 0
  %78 = vmatpush1.bf16.msra.mxu0 0
  %79 = vmatprep.subr.bf16.mxu0 0
  %80 = vmatpush1.bf16.msra.mxu0 0
  %81 = vmatprep.subr.bf16.mxu0 0
  %82 = vmatpush1.bf16.msra.mxu0 0
  %83 = vmatprep.subr.bf16.mxu0 0
  %84 = vmatpush1.bf16.msra.mxu0 0
  %85 = vmatprep.subr.bf16.mxu0 0
  %86 = vmatpush1.bf16.msra.mxu0 0
  %87 = vmatprep.subr.bf16.mxu0 0
  %88 = vmatpush1.bf16.msra.mxu0 0
  %89 = vmatprep.subr.bf16.mxu0 0
  %90 = vmatpush1.bf16.msra.mxu0 0
  %91 = vmatprep.mubr.bf16.mxu0 0
  %92 = vmatmul.mubr.bf16.gmra.mrb[0].mxu0 %v57
  %v93 = vpop.f32.mrb[0].mxu0
  %v94 = vadd.f32 0.0, %v93
  %v95 = vpop.f32.mrb[0].mxu0
  %v96 = vpop.f32.mrb[0].mxu0
  %v97 = vpop.f32.mrb[0].mxu0
  %98 = vdwg.mxu0
  %v99 = vld [vmem:[%s2] sm:$0x1]
  %v100 = vrot.slane %v94, 4
  %v101 = vadd.f32 %v94, %v100
  %v102 = vrot.slane %v101, 2
  %v103 = vadd.f32 %v101, %v102
  %v104 = vrot.slane %v103, 1
  %v105 = vadd.f32 %v103, %v104
  %v106 = vadd.f32 %v99, %v105
  %107 = vst [vmem:[%s2] sm:$0x1] %v106
  %v108 = vld [vmem:[%s3] sm:$0x1]
  %v109 = vmul.f32 %v94, %v94
  %v110 = vrot.slane %v109, 4
  %v111 = vadd.f32 %v109, %v110
  %v112 = vrot.slane %v111, 2
  %v113 = vadd.f32 %v111, %v112
  %v114 = vrot.slane %v113, 1
  %v115 = vadd.f32 %v113, %v114
  %v116 = vadd.f32 %v108, %v115
  %117 = vst [vmem:[%s3] sm:$0x1] %v116
  // Predicated region
  $region14: #{embedding_transform2.3} parent=0 // pred_check
    _
  $region15: #{embedding_transform2.3} parent=0 // pred_check_branch
    %119 = sbr.rel (0) target = $region17
  $region16: #{embedding_transform2.3} parent=0 // pred_region
    _
  $region17: #{embedding_transform2.3} parent=0 // pred_fallthru
    _
  // Predicated region
  $region18: #{embedding_transform2.3} parent=0 // pred_check
    _
  $region19: #{embedding_transform2.3} parent=0 // pred_check_branch
    %121 = sbr.rel (0) target = $region21
  $region20: #{embedding_transform2.3} parent=0 // pred_region
    _
  $region21: #{embedding_transform2.3} parent=0 // pred_fallthru
    _
  // Predicated region
  $region22: #{embedding_transform2.3} parent=0 // pred_check
    _
  $region23: #{embedding_transform2.3} parent=0 // pred_check_branch
    %123 = sbr.rel (0) target = $region25
  $region24: #{embedding_transform2.3} parent=0 // pred_region
    _
  $region25: #{embedding_transform2.3} parent=0 // pred_fallthru
    _
  // Predicated region
  $region26: #{embedding_transform2.3} parent=0 // pred_check
    _
  $region27: #{embedding_transform2.3} parent=0 // pred_check_branch
    %125 = sbr.rel (0) target = $region29
  $region28: #{embedding_transform2.3} parent=0 // pred_region
    _
  $region29: #{embedding_transform2.3} parent=0 // pred_fallthru
    _

// kernel: embedding_transform2.5
$region0: #{embedding_transform2.5}
  #allocation0 [shape = 'u32[]', space=smem, size = 0x4, offset = 0x4, fixed_abs, tag = 'smem constant byte address 0x4 - core index']
  #allocation1 [shape = 'u32[144,128]{1,0:T(1,128)}', space=vmem, size = 0x12000, scoped, tag = 'internal scratch']
  %s0 = inlined_call_operand.vmem [shape: f32[8,32], index: 0, kind: input, shape index: {}]
  %s1 = inlined_call_operand.vmem [shape: bf16[32,128], index: 1, kind: input, shape index: {}]
  %s2 = inlined_call_operand.vmem [shape: f32[1,1,128], index: 2, kind: input, shape index: {}]
  %s3 = inlined_call_operand.vmem [shape: f32[1,1,128], index: 3, kind: input, shape index: {}]
  %s4 = inlined_call_operand.vmem [shape: f32[1,128], index: 4, kind: input, shape index: {}]
  %s5 = inlined_call_operand.vmem [shape: f32[1,128], index: 5, kind: input, shape index: {}]
  %s6 = inlined_call_operand.vmem [shape: bf16[128,16], index: 6, kind: input, shape index: {}]
  %s7 = inlined_call_operand.vmem [shape: f32[1,1,16], index: 7, kind: input, shape index: {}]
  %s8 = inlined_call_operand.vmem [shape: f32[1,1,16], index: 8, kind: input, shape index: {}]
  %s9 = inlined_call_operand.vmem [shape: f32[1,16], index: 9, kind: input, shape index: {}]
  %s10 = inlined_call_operand.vmem [shape: f32[1,16], index: 10, kind: input, shape index: {}]
  %s11 = inlined_call_operand.hbm [shape: f32[8,16], index: 11, kind: output, shape index: {}]
  %s12 = sld [smem:[#allocation0]]
  $region54: #{embedding_transform2.5} parent=0
    _
  %s14 = ssub.s32 1, %s12
  %s15 = scalar_select 0, %s14, %s12
  $region1: #{embedding_transform2.5} parent=0
    #allocation2 [shape = 'u8[4096]{0}', space=vmem, size = 0x1000, scoped, tag = 'output window, operand 0, single buffered']
    #allocation3 [shape = 's32[1]{0}', space=sflag, size = 0x4, scoped, tag = 'scoped memory for embedding_transform2.5']
    %16 = vsyncpa [#allocation3], 0
    // Predicated region
    $region2: #{embedding_transform2.5} parent=1 // pred_check
      _
    $region3: #{embedding_transform2.5} parent=1 // pred_check_branch
      %18 = sbr.rel (0) target = $region5
    $region4: #{embedding_transform2.5} parent=1 // pred_region
      _
    $region5: #{embedding_transform2.5} parent=1 // pred_fallthru
      _
    // Predicated region
    $region6: #{embedding_transform2.5} parent=1 // pred_check
      _
    $region7: #{embedding_transform2.5} parent=1 // pred_check_branch
      %20 = sbr.rel (0) target = $region9
    $region8: #{embedding_transform2.5} parent=1 // pred_region
      _
    $region9: #{embedding_transform2.5} parent=1 // pred_fallthru
      _
    // Predicated region
    $region10: #{embedding_transform2.5} parent=1 // pred_check
      _
    $region11: #{embedding_transform2.5} parent=1 // pred_check_branch
      %22 = sbr.rel (0) target = $region13
    $region12: #{embedding_transform2.5} parent=1 // pred_region
      _
    $region13: #{embedding_transform2.5} parent=1 // pred_fallthru
      _
    // Predicated region
    $region14: #{embedding_transform2.5} parent=1 // pred_check
      _
    $region15: #{embedding_transform2.5} parent=1 // pred_check_branch
      %24 = sbr.rel (0) target = $region17
    $region16: #{embedding_transform2.5} parent=1 // pred_region
      _
    $region17: #{embedding_transform2.5} parent=1 // pred_fallthru
      _
    // Predicated region
    $region18: #{embedding_transform2.5} parent=1 // pred_check
      _
    $region19: #{embedding_transform2.5} parent=1 // pred_check_branch
      %26 = sbr.rel (0) target = $region21
    $region20: #{embedding_transform2.5} parent=1 // pred_region
      _
    $region21: #{embedding_transform2.5} parent=1 // pred_fallthru
      _
    // Predicated region
    $region22: #{embedding_transform2.5} parent=1 // pred_check
      _
    $region23: #{embedding_transform2.5} parent=1 // pred_check_branch
      %28 = sbr.rel (0) target = $region25
    $region24: #{embedding_transform2.5} parent=1 // pred_region
      _
    $region25: #{embedding_transform2.5} parent=1 // pred_fallthru
      _
    // Predicated region
    $region26: #{embedding_transform2.5} parent=1 // pred_check
      _
    $region27: #{embedding_transform2.5} parent=1 // pred_check_branch
      %30 = sbr.rel (0) target = $region29
    $region28: #{embedding_transform2.5} parent=1 // pred_region
      _
    $region29: #{embedding_transform2.5} parent=1 // pred_fallthru
      _
    // Predicated region
    $region30: #{embedding_transform2.5} parent=1 // pred_check
      _
    $region31: #{embedding_transform2.5} parent=1 // pred_check_branch
      %32 = sbr.rel (0) target = $region33
    $region32: #{embedding_transform2.5} parent=1 // pred_region
      _
    $region33: #{embedding_transform2.5} parent=1 // pred_fallthru
      _
    // Predicated region
    $region34: #{embedding_transform2.5} parent=1 // pred_check
      _
    $region35: #{embedding_transform2.5} parent=1 // pred_check_branch
      %34 = sbr.rel (0) target = $region37
    $region36: #{embedding_transform2.5} parent=1 // pred_region
      _
    $region37: #{embedding_transform2.5} parent=1 // pred_fallthru
      _
    // Predicated region
    $region38: #{embedding_transform2.5} parent=1 // pred_check
      _
    $region39: #{embedding_transform2.5} parent=1 // pred_check_branch
      %36 = sbr.rel (0) target = $region41
    $region40: #{embedding_transform2.5} parent=1 // pred_region
      _
    $region41: #{embedding_transform2.5} parent=1 // pred_fallthru
      _
    // Predicated region
    $region42: #{embedding_transform2.5} parent=1 // pred_check
      _
    $region43: #{embedding_transform2.5} parent=1 // pred_check_branch
      %38 = sbr.rel (0) target = $region45
    $region44: #{embedding_transform2.5} parent=1 // pred_region
      _
    $region45: #{embedding_transform2.5} parent=1 // pred_fallthru
      _
    %v40 = vld [vmem:[%s2] sm:$0x1]
    %v41 = vadd.f32 %v40, 0.0
    %v42 = vld [vmem:[%s3] sm:$0x1]
    %v43 = vadd.f32 %v42, 0.0
    %v44 = vmul.f32 %v41, 0.125
    %v45 = vmul.f32 %v43, 0.125
    %v46 = vmul.f32 %v44, %v44
    %v47 = vsub.f32 %v45, %v46
    %v48 = vmax.f32 %v47, 0.0
    %v49 = vld [vmem:[%s4] sm:$0x1]
    %v50 = vadd.f32 %v48, 1e-05
    %v51 = vrsqrt.pop %v50
    %v52 = vmul.f32 %v49, %v51
    %v53 = vld [vmem:[%s5] sm:$0x1]
    %v54 = vmul.f32 %v44, %v52
    %v55 = vsub.f32 %v53, %v54
    %v56 = vld [vmem:[%s7] sm:$0x1]
    %v57 = vadd.f32 %v56, 0.0
    %v58 = vld [vmem:[%s8] sm:$0x1]
    %v59 = vadd.f32 %v58, 0.0
    %v60 = vmul.f32 %v57, 0.125
    %v61 = vmul.f32 %v59, 0.125
    %v62 = vmul.f32 %v60, %v60
    %v63 = vsub.f32 %v61, %v62
    %v64 = vmax.f32 %v63, 0.0
    %v65 = vld [vmem:[%s9] sm:$0x1]
    %v66 = vadd.f32 %v64, 1e-05
    %v67 = vrsqrt.pop %v66
    %v68 = vmul.f32 %v65, %v67
    %v69 = vld [vmem:[%s10] sm:$0x1]
    %v70 = vmul.f32 %v60, %v68
    %v71 = vsub.f32 %v69, %v70
    %v72 = vld [vmem:[%s0] sm:$0xff]
    %v73 = vpack.c.bf16 %v72, %v72
    %v74 = vld [vmem:[%s1] sm:$0xf]
    %v75 = vld [vmem:[%s1 + $0x4] sm:$0xf]
    %v76 = vld [vmem:[%s1 + $0x8] sm:$0xf]
    %v77 = vld [vmem:[%s1 + $0xc] sm:$0xf]
    %v82 = vunpack.c.l.b16 %v74
    %v83 = vunpack.c.l.b16 %v75
    %v84 = vunpack.c.l.b16 %v76
    %v85 = vunpack.c.l.b16 %v77
    %v86 = vpack.c.b16 %v83, %v82
    %v87 = vpack.c.b16 %v85, %v84
    %vm90 = vcmask 261120
    %v92 = vsel %vm90, %v73, 0
    %94 = vmatprep.subr.bf16.mxu0 0
    %95 = vmatpush1.bf16.msra.mxu0 %v86
    %96 = vmatprep.subr.bf16.mxu0 0
    %97 = vmatpush1.bf16.msra.mxu0 %v87
    %98 = vmatprep.subr.bf16.mxu0 0
    %99 = vmatpush1.bf16.msra.mxu0 0
    %100 = vmatprep.subr.bf16.mxu0 0
    %101 = vmatpush1.bf16.msra.mxu0 0
    %102 = vmatprep.subr.bf16.mxu0 0
    %103 = vmatpush1.bf16.msra.mxu0 0
    %104 = vmatprep.subr.bf16.mxu0 0
    %105 = vmatpush1.bf16.msra.mxu0 0
    %106 = vmatprep.subr.bf16.mxu0 0
    %107 = vmatpush1.bf16.msra.mxu0 0
    %108 = vmatprep.subr.bf16.mxu0 0
    %109 = vmatpush1.bf16.msra.mxu0 0
    %110 = vmatprep.subr.bf16.mxu0 0
    %111 = vmatpush1.bf16.msra.mxu0 0
    %112 = vmatprep.subr.bf16.mxu0 0
    %113 = vmatpush1.bf16.msra.mxu0 0
    %114 = vmatprep.subr.bf16.mxu0 0
    %115 = vmatpush1.bf16.msra.mxu0 0
    %116 = vmatprep.subr.bf16.mxu0 0
    %117 = vmatpush1.bf16.msra.mxu0 0
    %118 = vmatprep.subr.bf16.mxu0 0
    %119 = vmatpush1.bf16.msra.mxu0 0
    %120 = vmatprep.subr.bf16.mxu0 0
    %121 = vmatpush1.bf16.msra.mxu0 0
    %122 = vmatprep.subr.bf16.mxu0 0
    %123 = vmatpush1.bf16.msra.mxu0 0
    %124 = vmatprep.subr.bf16.mxu0 0
    %125 = vmatpush1.bf16.msra.mxu0 0
    %126 = vmatprep.mubr.bf16.mxu0 0
    %127 = vmatmul.mubr.bf16.gmra.mrb[0].mxu0 %v92
    %v128 = vpop.f32.mrb[0].mxu0
    %v129 = vadd.f32 0.0, %v128
    %v130 = vpop.f32.mrb[0].mxu0
    %v131 = vpop.f32.mrb[0].mxu0
    %v132 = vpop.f32.mrb[0].mxu0
    %133 = vdwg.mxu0
    %v135 = vlaneseq
    %v136 = vshrl.u32 %v135, 7
    %v137 = vsub.s32 0, %v136
    %v138 = vrot.slane %v52, %v137
    %v140 = vmul.f32 %v129, %v138
    %v142 = vlaneseq
    %v143 = vshrl.u32 %v142, 7
    %v144 = vsub.s32 0, %v143
    %v145 = vrot.slane %v55, %v144
    %v147 = vadd.f32 %v140, %v145
    %v148 = vmax.f32 %v147, 0.0
    %v149 = vpack.c.bf16 %v148, %v148
    %v150 = vld [vmem:[%s6] sm:$0xf]
    %v151 = vld [vmem:[%s6 + $0x4] sm:$0xf]
    %v152 = vld [vmem:[%s6 + $0x8] sm:$0xf]
    %v153 = vld [vmem:[%s6 + $0xc] sm:$0xf]
    %v154 = vld [vmem:[%s6 + $0x10] sm:$0xf]
    %v155 = vld [vmem:[%s6 + $0x14] sm:$0xf]
    %v156 = vld [vmem:[%s6 + $0x18] sm:$0xf]
    %v157 = vld [vmem:[%s6 + $0x1c] sm:$0xf]
    %v158 = vld [vmem:[%s6 + $0x20] sm:$0xf]
    %v159 = vld [vmem:[%s6 + $0x24] sm:$0xf]
    %v160 = vld [vmem:[%s6 + $0x28] sm:$0xf]
    %v161 = vld [vmem:[%s6 + $0x2c] sm:$0xf]
    %v162 = vld [vmem:[%s6 + $0x30] sm:$0xf]
    %v163 = vld [vmem:[%s6 + $0x34] sm:$0xf]
    %v164 = vld [vmem:[%s6 + $0x38] sm:$0xf]
    %v165 = vld [vmem:[%s6 + $0x3c] sm:$0xf]
    %v182 = vunpack.c.l.b16 %v150
    %v183 = vunpack.c.l.b16 %v151
    %v184 = vunpack.c.l.b16 %v152
    %v185 = vunpack.c.l.b16 %v153
    %v186 = vunpack.c.l.b16 %v154
    %v187 = vunpack.c.l.b16 %v155
    %v188 = vunpack.c.l.b16 %v156
    %v189 = vunpack.c.l.b16 %v157
    %v190 = vunpack.c.l.b16 %v158
    %v191 = vunpack.c.l.b16 %v159
    %v192 = vunpack.c.l.b16 %v160
    %v193 = vunpack.c.l.b16 %v161
    %v194 = vunpack.c.l.b16 %v162
    %v195 = vunpack.c.l.b16 %v163
    %v196 = vunpack.c.l.b16 %v164
    %v197 = vunpack.c.l.b16 %v165
    %v198 = vpack.c.b16 %v183, %v182
    %v199 = vpack.c.b16 %v185, %v184
    %v200 = vpack.c.b16 %v187, %v186
    %v201 = vpack.c.b16 %v189, %v188
    %v202 = vpack.c.b16 %v191, %v190
    %v203 = vpack.c.b16 %v193, %v192
    %v204 = vpack.c.b16 %v195, %v194
    %v205 = vpack.c.b16 %v197, %v196
    %214 = vmatprep.subr.bf16.mxu0 0
    %215 = vmatpush1.bf16.msra.mxu0 %v198
    %216 = vmatprep.subr.bf16.mxu0 0
    %217 = vmatpush1.bf16.msra.mxu0 %v199
    %218 = vmatprep.subr.bf16.mxu0 0
    %219 = vmatpush1.bf16.msra.mxu0 %v200
    %220 = vmatprep.subr.bf16.mxu0 0
    %221 = vmatpush1.bf16.msra.mxu0 %v201
    %222 = vmatprep.subr.bf16.mxu0 0
    %223 = vmatpush1.bf16.msra.mxu0 %v202
    %224 = vmatprep.subr.bf16.mxu0 0
    %225 = vmatpush1.bf16.msra.mxu0 %v203
    %226 = vmatprep.subr.bf16.mxu0 0
    %227 = vmatpush1.bf16.msra.mxu0 %v204
    %228 = vmatprep.subr.bf16.mxu0 0
    %229 = vmatpush1.bf16.msra.mxu0 %v205
    %230 = vmatprep.subr.bf16.mxu0 0
    %231 = vmatpush1.bf16.msra.mxu0 0
    %232 = vmatprep.subr.bf16.mxu0 0
    %233 = vmatpush1.bf16.msra.mxu0 0
    %234 = vmatprep.subr.bf16.mxu0 0
    %235 = vmatpush1.bf16.msra.mxu0 0
    %236 = vmatprep.subr.bf16.mxu0 0
    %237 = vmatpush1.bf16.msra.mxu0 0
    %238 = vmatprep.subr.bf16.mxu0 0
    %239 = vmatpush1.bf16.msra.mxu0 0
    %240 = vmatprep.subr.bf16.mxu0 0
    %241 = vmatpush1.bf16.msra.mxu0 0
    %242 = vmatprep.subr.bf16.mxu0 0
    %243 = vmatpush1.bf16.msra.mxu0 0
    %244 = vmatprep.subr.bf16.mxu0 0
    %245 = vmatpush1.bf16.msra.mxu0 0
    %246 = vmatprep.mubr.bf16.mxu0 0
    %247 = vmatmul.mubr.bf16.gmra.mrb[0].mxu0 %v149
    %v248 = vpop.f32.mrb[0].mxu0
    %v249 = vadd.f32 0.0, %v248
    %v250 = vpop.f32.mrb[0].mxu0
    %v251 = vpop.f32.mrb[0].mxu0
    %v252 = vpop.f32.mrb[0].mxu0
    %253 = vdwg.mxu0
    %v255 = vlaneseq
    %v256 = vshrl.u32 %v255, 7
    %v257 = vsub.s32 0, %v256
    %v258 = vrot.slane %v68, %v257
    %v260 = vmul.f32 %v249, %v258
    %v262 = vlaneseq
    %v263 = vshrl.u32 %v262, 7
    %v264 = vsub.s32 0, %v263
    %v265 = vrot.slane %v71, %v264
    %v267 = vadd.f32 %v260, %v265
    %vm268 = vcmask 130048
    %269 = vst.msk [vmem:[#allocation2] sm:$0xff] %vm268, %v267
    // Predicated region
    $region46: #{embedding_transform2.5} parent=1 // pred_check
      _
    $region47: #{embedding_transform2.5} parent=1 // pred_check_branch
      %271 = sbr.rel (0) target = $region49
    $region48: #{embedding_transform2.5} parent=1 // pred_region
      %s273 = ssub.s32 128, 128
      %274 = vsyncadd [#allocation3], %s273
      %s276 = sshll.u32 [#allocation2], 4
      %s277 = int_to_ptr.vmem [resolvable:$true] %s276
      %279 = dma.vmem_to_hbm [thread:$0]  %s277, 128, %s11, [#allocation3]
    $region49: #{embedding_transform2.5} parent=1 // pred_fallthru
      _
    // Predicated region
    $region50: #{embedding_transform2.5} parent=1 // pred_check
      _
    $region51: #{embedding_transform2.5} parent=1 // pred_check_branch
      %281 = sbr.rel (0) target = $region53
    $region52: #{embedding_transform2.5} parent=1 // pred_region
      %282 = dma.done [#allocation3], 128
    $region53: #{embedding_transform2.5} parent=1 // pred_fallthru
      _
    %283 = vsyncpa [#allocation3], 1

// kernel: embedding_transform2.4
$region0: #{embedding_transform2.4}
  #allocation0 [shape = 'u32[]', space=smem, size = 0x4, offset = 0x4, fixed_abs, tag = 'smem constant byte address 0x4 - core index']
  #allocation1 [shape = 'u32[144,128]{1,0:T(1,128)}', space=vmem, size = 0x12000, scoped, tag = 'internal scratch']
  %s0 = inlined_call_operand.vmem [shape: f32[8,32], index: 0, kind: input, shape index: {}]
  %s1 = inlined_call_operand.vmem [shape: bf16[32,128], index: 1, kind: input, shape index: {}]
  %s2 = inlined_call_operand.vmem [shape: f32[1,1,128], index: 2, kind: input, shape index: {}]
  %s3 = inlined_call_operand.vmem [shape: f32[1,1,128], index: 3, kind: input, shape index: {}]
  %s4 = inlined_call_operand.vmem [shape: f32[1,128], index: 4, kind: input, shape index: {}]
  %s5 = inlined_call_operand.vmem [shape: f32[1,128], index: 5, kind: input, shape index: {}]
  %s6 = inlined_call_operand.vmem [shape: bf16[128,16], index: 6, kind: input, shape index: {}]
  %s7 = inlined_call_operand.vmem [shape: f32[1,1,16], index: 7, kind: output, shape index: {0}]
  %s8 = inlined_call_operand.vmem [shape: f32[1,1,16], index: 8, kind: output, shape index: {1}]
  %9 = xla_tuple %s7, %s8
  %s10 = sld [smem:[#allocation0]]
  $region50: #{embedding_transform2.4} parent=0
    _
  %s12 = ssub.s32 1, %s10
  %s13 = scalar_select 0, %s12, %s10
  // Predicated region
  $region2: #{embedding_transform2.4} parent=0 // pred_check
    _
  $region3: #{embedding_transform2.4} parent=0 // pred_check_branch
    %15 = sbr.rel (0) target = $region5
  $region4: #{embedding_transform2.4} parent=0 // pred_region
    %s16 = sadd.s32 0, 0
    %p17 = scmp.lt.s32.totalorder %s16, 0
    %s18 = scalar_select %p17, %s16, 0
    %s19 = smul.addr %s18, 8
    %s20 = scalar_lea.vmem %s0, %s19
    %s21 = sadd.s32 0, 0
  $region5: #{embedding_transform2.4} parent=0 // pred_fallthru
    _
  // Predicated region
  $region6: #{embedding_transform2.4} parent=0 // pred_check
    _
  $region7: #{embedding_transform2.4} parent=0 // pred_check_branch
    %23 = sbr.rel (0) target = $region9
  $region8: #{embedding_transform2.4} parent=0 // pred_region
    _
  $region9: #{embedding_transform2.4} parent=0 // pred_fallthru
    _
  // Predicated region
  $region10: #{embedding_transform2.4} parent=0 // pred_check
    _
  $region11: #{embedding_transform2.4} parent=0 // pred_check_branch
    %25 = sbr.rel (0) target = $region13
  $region12: #{embedding_transform2.4} parent=0 // pred_region
    _
  $region13: #{embedding_transform2.4} parent=0 // pred_fallthru
    _
  // Predicated region
  $region14: #{embedding_transform2.4} parent=0 // pred_check
    _
  $region15: #{embedding_transform2.4} parent=0 // pred_check_branch
    %27 = sbr.rel (0) target = $region17
  $region16: #{embedding_transform2.4} parent=0 // pred_region
    _
  $region17: #{embedding_transform2.4} parent=0 // pred_fallthru
    _
  // Predicated region
  $region18: #{embedding_transform2.4} parent=0 // pred_check
    _
  $region19: #{embedding_transform2.4} parent=0 // pred_check_branch
    %29 = sbr.rel (0) target = $region21
  $region20: #{embedding_transform2.4} parent=0 // pred_region
    _
  $region21: #{embedding_transform2.4} parent=0 // pred_fallthru
    _
  // Predicated region
  $region22: #{embedding_transform2.4} parent=0 // pred_check
    _
  $region23: #{embedding_transform2.4} parent=0 // pred_check_branch
    %31 = sbr.rel (0) target = $region25
  $region24: #{embedding_transform2.4} parent=0 // pred_region
    _
  $region25: #{embedding_transform2.4} parent=0 // pred_fallthru
    _
  // Predicated region
  $region26: #{embedding_transform2.4} parent=0 // pred_check
    _
  $region27: #{embedding_transform2.4} parent=0 // pred_check_branch
    %33 = sbr.rel (0) target = $region29
  $region28: #{embedding_transform2.4} parent=0 // pred_region
    _
  $region29: #{embedding_transform2.4} parent=0 // pred_fallthru
    _
  %s34 = sadd.s32 0, 0
  %p35 = scmp.lt.s32.totalorder %s34, 0
  %s36 = scalar_select %p35, %s34, 0
  %s37 = smul.addr %s36, 8
  %s38 = scalar_lea.vmem %s0, %s37
  %s39 = sadd.s32 0, 0
  %p40 = scmp.lt.s32.totalorder %s39, 0
  %s41 = scalar_select %p40, %s39, 0
  %s42 = smul.addr %s41, 8
  %s43 = scalar_lea.vmem %s0, %s42
  %s44 = sadd.s32 0, 0
  %p46 = scmp.eq.s32.totalorder 0, 0
  // Predicated region
  $region30: #{embedding_transform2.4} parent=0 // pred_check
    %p47 = pneg %p46
  $region31: #{embedding_transform2.4} parent=0 // pred_check_branch
    %49 = sbr.rel (%p47) target = $region33
  $region32: #{embedding_transform2.4} parent=0 // pred_region
    %vm50 = vcmask 122880
    %51 = vst.msk [vmem:[%s7] sm:$0x1] %vm50, 0.0
    %52 = vst.msk [vmem:[%s8] sm:$0x1] %vm50, 0.0
  $region33: #{embedding_transform2.4} parent=0 // pred_fallthru
    _
  %v53 = vld [vmem:[%s2] sm:$0x1]
  %v54 = vadd.f32 %v53, 0.0
  %v55 = vld [vmem:[%s3] sm:$0x1]
  %v56 = vadd.f32 %v55, 0.0
  %v57 = vmul.f32 %v54, 0.125
  %v58 = vmul.f32 %v56, 0.125
  %v59 = vmul.f32 %v57, %v57
  %v60 = vsub.f32 %v58, %v59
  %v61 = vmax.f32 %v60, 0.0
  %v62 = vld [vmem:[%s4] sm:$0x1]
  %v63 = vadd.f32 %v61, 1e-05
  %v64 = vrsqrt.pop %v63
  %v65 = vmul.f32 %v62, %v64
  %v66 = vld [vmem:[%s5] sm:$0x1]
  %v67 = vmul.f32 %v57, %v65
  %v68 = vsub.f32 %v66, %v67
  %v69 = vld [vmem:[%s43] sm:$0xff]
  %v70 = vpack.c.bf16 %v69, %v69
  %v71 = vld [vmem:[%s1] sm:$0xf]
  %v72 = vld [vmem:[%s1 + $0x4] sm:$0xf]
  %v73 = vld [vmem:[%s1 + $0x8] sm:$0xf]
  %v74 = vld [vmem:[%s1 + $0xc] sm:$0xf]
  %v79 = vunpack.c.l.b16 %v71
  %v80 = vunpack.c.l.b16 %v72
  %v81 = vunpack.c.l.b16 %v73
  %v82 = vunpack.c.l.b16 %v74
  %v83 = vpack.c.b16 %v80, %v79
  %v84 = vpack.c.b16 %v82, %v81
  %vm87 = vcmask 261120
  %v89 = vsel %vm87, %v70, 0
  %91 = vmatprep.subr.bf16.mxu0 0
  %92 = vmatpush1.bf16.msra.mxu0 %v83
  %93 = vmatprep.subr.bf16.mxu0 0
  %94 = vmatpush1.bf16.msra.mxu0 %v84
  %95 = vmatprep.subr.bf16.mxu0 0
  %96 = vmatpush1.bf16.msra.mxu0 0
  %97 = vmatprep.subr.bf16.mxu0 0
  %98 = vmatpush1.bf16.msra.mxu0 0
  %99 = vmatprep.subr.bf16.mxu0 0
  %100 = vmatpush1.bf16.msra.mxu0 0
  %101 = vmatprep.subr.bf16.mxu0 0
  %102 = vmatpush1.bf16.msra.mxu0 0
  %103 = vmatprep.subr.bf16.mxu0 0
  %104 = vmatpush1.bf16.msra.mxu0 0
  %105 = vmatprep.subr.bf16.mxu0 0
  %106 = vmatpush1.bf16.msra.mxu0 0
  %107 = vmatprep.subr.bf16.mxu0 0
  %108 = vmatpush1.bf16.msra.mxu0 0
  %109 = vmatprep.subr.bf16.mxu0 0
  %110 = vmatpush1.bf16.msra.mxu0 0
  %111 = vmatprep.subr.bf16.mxu0 0
  %112 = vmatpush1.bf16.msra.mxu0 0
  %113 = vmatprep.subr.bf16.mxu0 0
  %114 = vmatpush1.bf16.msra.mxu0 0
  %115 = vmatprep.subr.bf16.mxu0 0
  %116 = vmatpush1.bf16.msra.mxu0 0
  %117 = vmatprep.subr.bf16.mxu0 0
  %118 = vmatpush1.bf16.msra.mxu0 0
  %119 = vmatprep.subr.bf16.mxu0 0
  %120 = vmatpush1.bf16.msra.mxu0 0
  %121 = vmatprep.subr.bf16.mxu0 0
  %122 = vmatpush1.bf16.msra.mxu0 0
  %123 = vmatprep.mubr.bf16.mxu0 0
  %124 = vmatmul.mubr.bf16.gmra.mrb[0].mxu0 %v89
  %v125 = vpop.f32.mrb[0].mxu0
  %v126 = vadd.f32 0.0, %v125
  %v127 = vpop.f32.mrb[0].mxu0
  %v128 = vpop.f32.mrb[0].mxu0
  %v129 = vpop.f32.mrb[0].mxu0
  %130 = vdwg.mxu0
  %v132 = vlaneseq
  %v133 = vshrl.u32 %v132, 7
  %v134 = vsub.s32 0, %v133
  %v135 = vrot.slane %v65, %v134
  %v137 = vmul.f32 %v126, %v135
  %v139 = vlaneseq
  %v140 = vshrl.u32 %v139, 7
  %v141 = vsub.s32 0, %v140
  %v142 = vrot.slane %v68, %v141
  %v144 = vadd.f32 %v137, %v142
  %v145 = vmax.f32 %v144, 0.0
  %v146 = vpack.c.bf16 %v145, %v145
  %v147 = vld [vmem:[%s6] sm:$0xf]
  %v148 = vld [vmem:[%s6 + $0x4] sm:$0xf]
  %v149 = vld [vmem:[%s6 + $0x8] sm:$0xf]
  %v150 = vld [vmem:[%s6 + $0xc] sm:$0xf]
  %v151 = vld [vmem:[%s6 + $0x10] sm:$0xf]
  %v152 = vld [vmem:[%s6 + $0x14] sm:$0xf]
  %v153 = vld [vmem:[%s6 + $0x18] sm:$0xf]
  %v154 = vld [vmem:[%s6 + $0x1c] sm:$0xf]
  %v155 = vld [vmem:[%s6 + $0x20] sm:$0xf]
  %v156 = vld [vmem:[%s6 + $0x24] sm:$0xf]
  %v157 = vld [vmem:[%s6 + $0x28] sm:$0xf]
  %v158 = vld [vmem:[%s6 + $0x2c] sm:$0xf]
  %v159 = vld [vmem:[%s6 + $0x30] sm:$0xf]
  %v160 = vld [vmem:[%s6 + $0x34] sm:$0xf]
  %v161 = vld [vmem:[%s6 + $0x38] sm:$0xf]
  %v162 = vld [vmem:[%s6 + $0x3c] sm:$0xf]
  %v179 = vunpack.c.l.b16 %v147
  %v180 = vunpack.c.l.b16 %v148
  %v181 = vunpack.c.l.b16 %v149
  %v182 = vunpack.c.l.b16 %v150
  %v183 = vunpack.c.l.b16 %v151
  %v184 = vunpack.c.l.b16 %v152
  %v185 = vunpack.c.l.b16 %v153
  %v186 = vunpack.c.l.b16 %v154
  %v187 = vunpack.c.l.b16 %v155
  %v188 = vunpack.c.l.b16 %v156
  %v189 = vunpack.c.l.b16 %v157
  %v190 = vunpack.c.l.b16 %v158
  %v191 = vunpack.c.l.b16 %v159
  %v192 = vunpack.c.l.b16 %v160
  %v193 = vunpack.c.l.b16 %v161
  %v194 = vunpack.c.l.b16 %v162
  %v195 = vpack.c.b16 %v180, %v179
  %v196 = vpack.c.b16 %v182, %v181
  %v197 = vpack.c.b16 %v184, %v183
  %v198 = vpack.c.b16 %v186, %v185
  %v199 = vpack.c.b16 %v188, %v187
  %v200 = vpack.c.b16 %v190, %v189
  %v201 = vpack.c.b16 %v192, %v191
  %v202 = vpack.c.b16 %v194, %v193
  %211 = vmatprep.subr.bf16.mxu0 0
  %212 = vmatpush1.bf16.msra.mxu0 %v195
  %213 = vmatprep.subr.bf16.mxu0 0
  %214 = vmatpush1.bf16.msra.mxu0 %v196
  %215 = vmatprep.subr.bf16.mxu0 0
  %216 = vmatpush1.bf16.msra.mxu0 %v197
  %217 = vmatprep.subr.bf16.mxu0 0
  %218 = vmatpush1.bf16.msra.mxu0 %v198
  %219 = vmatprep.subr.bf16.mxu0 0
  %220 = vmatpush1.bf16.msra.mxu0 %v199
  %221 = vmatprep.subr.bf16.mxu0 0
  %222 = vmatpush1.bf16.msra.mxu0 %v200
  %223 = vmatprep.subr.bf16.mxu0 0
  %224 = vmatpush1.bf16.msra.mxu0 %v201
  %225 = vmatprep.subr.bf16.mxu0 0
  %226 = vmatpush1.bf16.msra.mxu0 %v202
  %227 = vmatprep.subr.bf16.mxu0 0
  %228 = vmatpush1.bf16.msra.mxu0 0
  %229 = vmatprep.subr.bf16.mxu0 0
  %230 = vmatpush1.bf16.msra.mxu0 0
  %231 = vmatprep.subr.bf16.mxu0 0
  %232 = vmatpush1.bf16.msra.mxu0 0
  %233 = vmatprep.subr.bf16.mxu0 0
  %234 = vmatpush1.bf16.msra.mxu0 0
  %235 = vmatprep.subr.bf16.mxu0 0
  %236 = vmatpush1.bf16.msra.mxu0 0
  %237 = vmatprep.subr.bf16.mxu0 0
  %238 = vmatpush1.bf16.msra.mxu0 0
  %239 = vmatprep.subr.bf16.mxu0 0
  %240 = vmatpush1.bf16.msra.mxu0 0
  %241 = vmatprep.subr.bf16.mxu0 0
  %242 = vmatpush1.bf16.msra.mxu0 0
  %243 = vmatprep.mubr.bf16.mxu0 0
  %244 = vmatmul.mubr.bf16.gmra.mrb[0].mxu0 %v146
  %v245 = vpop.f32.mrb[0].mxu0
  %v246 = vadd.f32 0.0, %v245
  %v247 = vpop.f32.mrb[0].mxu0
  %v248 = vpop.f32.mrb[0].mxu0
  %v249 = vpop.f32.mrb[0].mxu0
  %250 = vdwg.mxu0
  %s251 = sadd.s32 0, 0
  %s252 = smul.u32 %s251, 8
  %v253 = vlaneseq
  %v254 = vshrl.u32 %v253, 7
  %v255 = vstv %s252
  %v256 = vadd.s32 %v255, %v254
  %vm257 = vcmp.lt.s32.totalorder %v256, 8
  %v258 = vsel %vm257, 1, 0
  %vm259 = vcmp.eq.s32.totalorder %v258, 1
  %v260 = vsel %vm259, %v246, 0.0
  %v261 = vld [vmem:[%s7] sm:$0x1]
  %vm262 = vcmask 130048
  %v263 = vsel %vm262, %v260, 0.0
  %v264 = vrot.slane %v263, 4
  %v265 = vadd.f32 %v263, %v264
  %v266 = vrot.slane %v265, 2
  %v267 = vadd.f32 %v265, %v266
  %v268 = vrot.slane %v267, 1
  %v269 = vadd.f32 %v267, %v268
  %v270 = vadd.f32 %v261, %v269
  %vm271 = vcmask 122880
  %272 = vst.msk [vmem:[%s7] sm:$0x1] %vm271, %v270
  %v273 = vld [vmem:[%s8] sm:$0x1]
  %v274 = vmul.f32 %v260, %v260
  %v275 = vsel %vm262, %v274, 0.0
  %v276 = vrot.slane %v275, 4
  %v277 = vadd.f32 %v275, %v276
  %v278 = vrot.slane %v277, 2
  %v279 = vadd.f32 %v277, %v278
  %v280 = vrot.slane %v279, 1
  %v281 = vadd.f32 %v279, %v280
  %v282 = vadd.f32 %v273, %v281
  %283 = vst.msk [vmem:[%s8] sm:$0x1] %vm271, %v282
  // Predicated region
  $region34: #{embedding_transform2.4} parent=0 // pred_check
    _
  $region35: #{embedding_transform2.4} parent=0 // pred_check_branch
    %285 = sbr.rel (0) target = $region37
  $region36: #{embedding_transform2.4} parent=0 // pred_region
    _
  $region37: #{embedding_transform2.4} parent=0 // pred_fallthru
    _
  // Predicated region
  $region38: #{embedding_transform2.4} parent=0 // pred_check
    _
  $region39: #{embedding_transform2.4} parent=0 // pred_check_branch
    %287 = sbr.rel (0) target = $region41
  $region40: #{embedding_transform2.4} parent=0 // pred_region
    _
  $region41: #{embedding_transform2.4} parent=0 // pred_fallthru
    _
  // Predicated region
  $region42: #{embedding_transform2.4} parent=0 // pred_check
    _
  $region43: #{embedding_transform2.4} parent=0 // pred_check_branch
    %289 = sbr.rel (0) target = $region45
  $region44: #{embedding_transform2.4} parent=0 // pred_region
    _
  $region45: #{embedding_transform2.4} parent=0 // pred_fallthru
    _
  // Predicated region
  $region46: #{embedding_transform2.4} parent=0 // pred_check
    _
  $region47: #{embedding_transform2.4} parent=0 // pred_check_branch
    %291 = sbr.rel (0) target = $region49
  $region48: #{embedding_transform2.4} parent=0 // pred_region
    _
  $region49: #{embedding_transform2.4} parent=0 // pred_fallthru
    _

</llo_original>
